<compile_context>
chip_gen: v5e
topology: v5e:2x2
jax: 0.10.0
libtpu: 0.0.40
codegen_flags: <defaults>
</compile_context>

<pallas_src>
import functools

import jax
import jax.numpy as jnp
from jax import lax
from jax.experimental import pallas as pl
from jax.experimental.pallas import tpu as pltpu


def _round_up(n, m):
    return ((n + m - 1) // m) * m


def _cdiv(a, b):
    return (a + b - 1) // b


def _jacobi_theta(i, a, b):
    theta_k = (2 * i + a + b) * (2 * i + a + b - 1) / (2 * i * (i + a + b))
    theta_k1 = ((2 * i + a + b - 1) * (a * a - b * b)
                / (2 * i * (i + a + b) * (2 * i + a + b - 2)))
    theta_k2 = ((i + a - 1) * (i + b - 1) * (2 * i + a + b)
                / (i * (i + a + b) * (2 * i + a + b - 2)))
    return theta_k, theta_k1, theta_k2


def _pad_lanes(x, width):
    """Pad the last (lane) axis with zeros up to `width` (concat = cheap)."""
    cur = x.shape[-1]
    if cur == width:
        return x
    zeros = jnp.zeros(x.shape[:-1] + (width - cur,), x.dtype)
    return jnp.concatenate([x, zeros], axis=-1)


def _jacobi_kan_fused_kernel(*refs, num_layers, degree, a, b, layer_dims,
                             out_pad, matmul_dtype, eps=1e-5):
    """Fused Jacobi_KAN stack on one (tb, in_pad0) batch tile.

    refs layout (inputs, then the single output):
      refs[0]                x tile        (tb, in_pad0)            f32
      refs[1 + 4*l + 0]      coeff_flat_l  (degree*in_pad_l, out_l) matmul dtype
      refs[1 + 4*l + 1]      bias0_l       (1, out_l)               f32
      refs[1 + 4*l + 2]      gamma_l       (1, out_l)               f32
      refs[1 + 4*l + 3]      beta_l        (1, out_l)               f32
      refs[1 + 4*num_layers] output tile   (tb, out_pad)            f32

    layer_dims: tuple of (in_dim, in_pad, out_dim) per layer.
    """
    x_ref = refs[0]
    o_ref = refs[1 + 4 * num_layers]

    h = x_ref[...].astype(jnp.float32)                    # (tb, in_pad0)
    for l in range(num_layers):
        coeff_ref, bias0_ref, gamma_ref, beta_ref = refs[1 + 4 * l: 5 + 4 * l]
        _, in_pad, _ = layer_dims[l]

        # Elementwise stage in f32 (v5e-safe).  Padded lanes carry harmless
        # values; their coefficient rows are zero so they contribute nothing.
        # TODO(synk): at tiny hidden dims the VPU lanes are <=50% occupied;
        # packing 128//in_dim batch rows onto the lane axis would densify this
        # stage but requires a per-layer relayout — skipped at degree=3.
        xt = jnp.tanh(h)
        xt = _pad_lanes(xt, in_pad)                        # (tb, in_pad)

        # Jacobi recurrence; degree-0 term is folded into bias0 (P0 == 1).
        # Each poly is cast to the matmul dtype as it is produced so only
        # p_prev/p_curr remain live in f32.
        p_prev = jnp.ones_like(xt)
        p_curr = (a - b + (a + b + 2.0) * xt) * 0.5
        polys = [p_curr.astype(matmul_dtype)]
        for i in range(2, degree + 1):
            theta_k, theta_k1, theta_k2 = _jacobi_theta(i, a, b)
            p_next = (theta_k * xt + theta_k1) * p_curr - theta_k2 * p_prev
            polys.append(p_next.astype(matmul_dtype))
            p_prev, p_curr = p_curr, p_next

        # Single MXU matmul: K = degree * in_pad (multiple of 128), d-major
        # concat matches the d-major flattening of the coefficients.
        p_cat = jnp.concatenate(polys, axis=-1)            # (tb, degree*in_pad)
        y = jnp.dot(p_cat, coeff_ref[...], preferred_element_type=jnp.float32)
        y = y + bias0_ref[...]                             # degree-0 contribution

        # LayerNorm over the (unpadded) output feature dim, torch eps=1e-5.
        mean = jnp.mean(y, axis=-1, keepdims=True)
        var = jnp.mean((y - mean) ** 2, axis=-1, keepdims=True)
        h = (y - mean) * lax.rsqrt(var + eps) * gamma_ref[...] + beta_ref[...]

    # Lane-dense store: pad to out_pad (multiple of 128); wrapper slices back.
    o_ref[...] = _pad_lanes(h, out_pad).astype(o_ref.dtype)


def jacobi_kan_forward(x, params, *, degree, a=1.0, b=1.0, tb=512,
                       matmul_dtype=jnp.bfloat16):
    """Full Jacobi_KAN forward as one fused Pallas kernel.

    x:      any shape; flattened to (-1, layers_hidden[0]) like torch.reshape.
    params: list of (coeffs (in, out, degree+1) f32, gamma (out,), beta (out,)).
    """
    assert degree >= 1, "fused kernel expects degree >= 1 (module default is 3)"

    num_layers = len(params)
    in0 = params[0][0].shape[0]
    x2 = jnp.reshape(x, (-1, in0)).astype(jnp.float32)
    B = x2.shape[0]

    # --- batch tiling: pad only to a multiple of 8, keep >=2 tiles when
    # possible so the "parallel" grid axis can shard across v7x's two TCs. ---
    B8 = _round_up(max(B, 1), 8)
    min_tiles = 2 if B8 >= 16 else 1
    n_tiles = max(_cdiv(B8, tb), min_tiles)
    tb_eff = _round_up(_cdiv(B8, n_tiles), 8)
    n_tiles = _cdiv(B8, tb_eff)
    B_pad = n_tiles * tb_eff

    in_pad0 = _round_up(in0, 128)
    if (B_pad, in_pad0) != (B, in0):
        x2 = jnp.pad(x2, ((0, B_pad - B), (0, in_pad0 - in0)))

    # --- per-layer weight preparation (host/XLA side) ---
    layer_dims = []
    weight_arrays = []
    prev_out = in0
    for (coeffs, gamma, beta) in params:
        in_dim, out_dim, dp1 = coeffs.shape
        assert dp1 == degree + 1 and in_dim == prev_out
        prev_out = out_dim
        in_pad = _round_up(in_dim, 128)
        layer_dims.append((in_dim, in_pad, out_dim))

        # Degrees 1..D, flattened d-major with lane-aligned (in_pad) slabs.
        cd = jnp.transpose(coeffs[:, :, 1:], (2, 0, 1))          # (deg, in, out)
        if in_pad != in_dim:
            cd = jnp.pad(cd, ((0, 0), (0, in_pad - in_dim), (0, 0)))
        coeff_flat = cd.reshape(degree * in_pad, out_dim).astype(matmul_dtype)
        # Degree-0 term is x-independent: fold it into an f32 bias.
        bias0 = jnp.sum(coeffs[:, :, 0], axis=0).reshape(1, out_dim)
        weight_arrays += [
            coeff_flat,
            bias0.astype(jnp.float32),
            jnp.reshape(gamma, (1, out_dim)).astype(jnp.float32),
            jnp.reshape(beta, (1, out_dim)).astype(jnp.float32),
        ]

    out_last = params[-1][0].shape[1]
    out_pad = _round_up(out_last, 128)
    layer_dims = tuple(layer_dims)

    # --- explicit VMEM budget: tiles (double-buffered) + resident weights +
    # worst-case per-layer intermediates, clamped to the chip's capacity. ---
    itm = jnp.dtype(matmul_dtype).itemsize

    def _footprint(weight_bufs):
        fp = 2 * tb_eff * in_pad0 * 4 + 2 * tb_eff * out_pad * 4
        inter = 0
        for (_, in_pad, out_dim) in layer_dims:
            fp += weight_bufs * (degree * in_pad * out_dim * itm + 3 * out_dim * 4)
            inter = max(inter, tb_eff * (2 * degree * in_pad * itm
                                         + 4 * in_pad * 4 + 4 * out_dim * 4))
        return fp + inter

    try:
        vmem_cap = int(pltpu.get_tpu_info().vmem_capacity_bytes)
    except Exception:
        vmem_cap = 64 * 1024 * 1024   # safe on every generation (v7x physical)

    kernel = functools.partial(
        _jacobi_kan_fused_kernel, num_layers=num_layers, degree=degree,
        a=a, b=b, layer_dims=layer_dims, out_pad=out_pad,
        matmul_dtype=matmul_dtype)

    def _build(single_buffer_weights):
        wmode = ({"pipeline_mode": pl.Buffered(1)}
                 if single_buffer_weights else {})
        in_specs = [pl.BlockSpec((tb_eff, in_pad0), lambda i: (i, 0))]
        for (_, in_pad, out_dim) in layer_dims:
            in_specs += [
                pl.BlockSpec((degree * in_pad, out_dim), lambda i: (0, 0), **wmode),
                pl.BlockSpec((1, out_dim), lambda i: (0, 0), **wmode),
                pl.BlockSpec((1, out_dim), lambda i: (0, 0), **wmode),
                pl.BlockSpec((1, out_dim), lambda i: (0, 0), **wmode),
            ]
        weight_bufs = 1 if single_buffer_weights else 2
        vmem_limit = min(max(_footprint(weight_bufs) + (8 << 20), 32 << 20),
                         vmem_cap)
        return pl.pallas_call(
            kernel,
            out_shape=jax.ShapeDtypeStruct((B_pad, out_pad), jnp.float32),
            grid_spec=pltpu.PrefetchScalarGridSpec(
                num_scalar_prefetch=0,
                grid=(n_tiles,),
                in_specs=in_specs,
                out_specs=pl.BlockSpec((tb_eff, out_pad), lambda i: (i, 0)),
            ),
            compiler_params=pltpu.CompilerParams(
                dimension_semantics=("parallel",),
                vmem_limit_bytes=int(vmem_limit)),
        )

    inputs = [x2] + weight_arrays
    try:
        out = _build(True)(*inputs)          # single-buffered invariant weights
    except Exception:
        out = _build(False)(*inputs)         # fallback: default double-buffering
    return out[:B, :out_last]


def init_jacobi_kan_params(key, layers_hidden, degree):
    """Deterministic synthetic params matching the PyTorch module's shapes."""
    params = []
    for in_dim, out_dim in zip(layers_hidden[:-1], layers_hidden[1:]):
        key, sub = jax.random.split(key)
        std = 1.0 / (in_dim * (degree + 1))
        # nn.Parameter shape: (in_dim, out_dim, degree+1)
        coeffs = jax.random.normal(sub, (in_dim, out_dim, degree + 1),
                                   dtype=jnp.float32) * std
        gamma = jnp.ones((out_dim,), jnp.float32)   # LayerNorm weight
        beta = jnp.zeros((out_dim,), jnp.float32)   # LayerNorm bias
        params.append((coeffs, gamma, beta))
    return params


def _reference_forward(x, params, *, degree, a=1.0, b=1.0):
    """Pure-JAX mirror of the PyTorch forward (for sanity checks)."""
    for (coeffs, gamma, beta) in params:
        in_dim = coeffs.shape[0]
        xr = jnp.reshape(x, (-1, in_dim))
        xt = jnp.tanh(xr)
        polys = [jnp.ones_like(xt)]
        if degree > 0:
            polys.append((a - b + (a + b + 2.0) * xt) / 2.0)
        for i in range(2, degree + 1):
            theta_k, theta_k1, theta_k2 = _jacobi_theta(i, a, b)
            polys.append((theta_k * xt + theta_k1) * polys[-1] - theta_k2 * polys[-2])
        jac = jnp.stack(polys, axis=-1)                       # (B, in, D+1)
        y = jnp.einsum('bid,iod->bo', jac, coeffs)
        mean = jnp.mean(y, axis=-1, keepdims=True)
        var = jnp.mean((y - mean) ** 2, axis=-1, keepdims=True)
        x = (y - mean) * lax.rsqrt(var + 1e-5) * gamma + beta
    return x


if __name__ == "__main__":
    layers_hidden = [32, 64, 32]
    degree = 3
    a = b = 1.0

    key = jax.random.PRNGKey(0)
    k_x, k_p = jax.random.split(key)

    # x: (batch=2, seq=8, hidden=32) -> flattened to (16, 32) inside the forward
    x = jax.random.normal(k_x, (2, 8, 32), dtype=jnp.float32)
    params = init_jacobi_kan_params(k_p, layers_hidden, degree)

    ref = _reference_forward(x, params, degree=degree, a=a, b=b)

    # 1) f32-matmul path: verifies the fused kernel math (recurrence, aligned
    #    K layout, folded bias, LayerNorm, padding/slicing) against reference.
    out_f32 = jacobi_kan_forward(x, params, degree=degree, a=a, b=b,
                                 matmul_dtype=jnp.float32)
    out_f32 = jax.block_until_ready(out_f32)
    assert out_f32.shape == (16, layers_hidden[-1])
    err_f32 = float(jnp.max(jnp.abs(out_f32 - ref)))
    assert err_f32 < 1e-2, err_f32

    # 2) default performance path: bf16 MXU inputs, f32 accumulate/LayerNorm.
    #    Output is unit-scale after LayerNorm, so this is a few-percent check.
    out_bf16 = jax.block_until_ready(
        jacobi_kan_forward(x, params, degree=degree, a=a, b=b))
    assert out_bf16.shape == (16, layers_hidden[-1])
    err_bf16 = float(jnp.max(jnp.abs(out_bf16 - ref)))
    assert err_bf16 < 0.2, err_bf16

    print("KERNEL_OK")
</pallas_src>

<mosaic_0001>
module attributes {stable_mosaic.version = 11 : i64} {
  func.func @_jacobi_kan_fused_kernel(%arg0: i32, %arg1: memref<8x128xf32, #tpu.memory_space<vmem>>, %arg2: memref<384x64xf32, #tpu.memory_space<vmem>>, %arg3: memref<1x64xf32, #tpu.memory_space<vmem>>, %arg4: memref<1x64xf32, #tpu.memory_space<vmem>>, %arg5: memref<1x64xf32, #tpu.memory_space<vmem>>, %arg6: memref<384x32xf32, #tpu.memory_space<vmem>>, %arg7: memref<1x32xf32, #tpu.memory_space<vmem>>, %arg8: memref<1x32xf32, #tpu.memory_space<vmem>>, %arg9: memref<1x32xf32, #tpu.memory_space<vmem>>, %arg10: memref<8x128xf32, #tpu.memory_space<vmem>>) attributes {dimension_semantics = [#tpu.dimension_semantics<parallel>], iteration_bounds = array<i64: 2>, scalar_prefetch = 0 : i64, scratch_operands = 0 : i64, tpu.core_type = #tpu.core_type<tc>, window_params = [{transform_indices = @transform_0, window_bounds = array<i64: 8, 128>}, {pipeline_mode = #tpu.pipeline_mode<synchronous>, transform_indices = @transform_1, window_bounds = array<i64: 384, 64>}, {pipeline_mode = #tpu.pipeline_mode<synchronous>, transform_indices = @transform_2, window_bounds = array<i64: 1, 64>}, {pipeline_mode = #tpu.pipeline_mode<synchronous>, transform_indices = @transform_3, window_bounds = array<i64: 1, 64>}, {pipeline_mode = #tpu.pipeline_mode<synchronous>, transform_indices = @transform_4, window_bounds = array<i64: 1, 64>}, {pipeline_mode = #tpu.pipeline_mode<synchronous>, transform_indices = @transform_5, window_bounds = array<i64: 384, 32>}, {pipeline_mode = #tpu.pipeline_mode<synchronous>, transform_indices = @transform_6, window_bounds = array<i64: 1, 32>}, {pipeline_mode = #tpu.pipeline_mode<synchronous>, transform_indices = @transform_7, window_bounds = array<i64: 1, 32>}, {pipeline_mode = #tpu.pipeline_mode<synchronous>, transform_indices = @transform_8, window_bounds = array<i64: 1, 32>}, {transform_indices = @transform_9, window_bounds = array<i64: 8, 128>}]} {
    %c0 = arith.constant 0 : index
    %c0_0 = arith.constant 0 : index
    %0 = vector.load %arg1[%c0, %c0_0] : memref<8x128xf32, #tpu.memory_space<vmem>>, vector<8x128xf32>
    %1 = math.tanh %0 : vector<8x128xf32>
    %cst = arith.constant 1.000000e+00 : f32
    %2 = vector.broadcast %cst : f32 to vector<8x128xf32>
    %cst_1 = arith.constant 4.000000e+00 : f32
    %3 = vector.broadcast %cst_1 : f32 to vector<8x128xf32>
    %4 = arith.mulf %3, %1 : vector<8x128xf32>
    %cst_2 = arith.constant 0.000000e+00 : f32
    %5 = vector.broadcast %cst_2 : f32 to vector<8x128xf32>
    %6 = arith.addf %5, %4 : vector<8x128xf32>
    %cst_3 = arith.constant 5.000000e-01 : f32
    %7 = vector.broadcast %cst_3 : f32 to vector<8x128xf32>
    %8 = arith.mulf %6, %7 : vector<8x128xf32>
    %cst_4 = arith.constant 1.875000e+00 : f32
    %9 = vector.broadcast %cst_4 : f32 to vector<8x128xf32>
    %10 = arith.mulf %9, %1 : vector<8x128xf32>
    %cst_5 = arith.constant 0.000000e+00 : f32
    %11 = vector.broadcast %cst_5 : f32 to vector<8x128xf32>
    %12 = arith.addf %10, %11 : vector<8x128xf32>
    %13 = arith.mulf %12, %8 : vector<8x128xf32>
    %cst_6 = arith.constant 7.500000e-01 : f32
    %14 = vector.broadcast %cst_6 : f32 to vector<8x128xf32>
    %15 = arith.mulf %14, %2 : vector<8x128xf32>
    %16 = arith.subf %13, %15 : vector<8x128xf32>
    %cst_7 = arith.constant 1.86666667 : f32
    %17 = vector.broadcast %cst_7 : f32 to vector<8x128xf32>
    %18 = arith.mulf %17, %1 : vector<8x128xf32>
    %cst_8 = arith.constant 0.000000e+00 : f32
    %19 = vector.broadcast %cst_8 : f32 to vector<8x128xf32>
    %20 = arith.addf %18, %19 : vector<8x128xf32>
    %21 = arith.mulf %20, %16 : vector<8x128xf32>
    %cst_9 = arith.constant 8.000000e-01 : f32
    %22 = vector.broadcast %cst_9 : f32 to vector<8x128xf32>
    %23 = arith.mulf %22, %8 : vector<8x128xf32>
    %24 = arith.subf %21, %23 : vector<8x128xf32>
    %25 = tpu.concatenate %8, %16, %24 in 1 : vector<8x128xf32>, vector<8x128xf32>, vector<8x128xf32> -> vector<8x384xf32>
    %c0_10 = arith.constant 0 : index
    %c0_11 = arith.constant 0 : index
    %26 = vector.load %arg2[%c0_10, %c0_11] : memref<384x64xf32, #tpu.memory_space<vmem>>, vector<384x64xf32>
    %cst_12 = arith.constant dense<0.000000e+00> : vector<8x64xf32>
    %27 = tpu.matmul %25, %26, %cst_12 {dimension_numbers = #tpu.dot_dimension_numbers<[1], [0], [0], [1], [0, 0, 1, 1], [], []>} : vector<8x384xf32>, vector<384x64xf32>, vector<8x64xf32> -> vector<8x64xf32>
    %c0_13 = arith.constant 0 : index
    %c0_14 = arith.constant 0 : index
    %28 = vector.load %arg3[%c0_13, %c0_14] : memref<1x64xf32, #tpu.memory_space<vmem>>, vector<1x64xf32>
    %29 = vector.broadcast %28 : vector<1x64xf32> to vector<8x64xf32>
    %30 = arith.addf %27, %29 : vector<8x64xf32>
    %cst_15 = arith.constant dense<0.000000e+00> : vector<8xf32>
    %31 = vector.multi_reduction <add>, %30, %cst_15 [1] : vector<8x64xf32> to vector<8xf32>
    %32 = vector.shape_cast %31 : vector<8xf32> to vector<8x1xf32>
    %cst_16 = arith.constant 6.400000e+01 : f32
    %33 = vector.broadcast %cst_16 : f32 to vector<8x1xf32>
    %34 = arith.divf %32, %33 : vector<8x1xf32>
    %35 = vector.broadcast %34 : vector<8x1xf32> to vector<8x64xf32>
    %36 = arith.subf %30, %35 : vector<8x64xf32>
    %37 = arith.mulf %36, %36 : vector<8x64xf32>
    %cst_17 = arith.constant dense<0.000000e+00> : vector<8xf32>
    %38 = vector.multi_reduction <add>, %37, %cst_17 [1] : vector<8x64xf32> to vector<8xf32>
    %39 = vector.shape_cast %38 : vector<8xf32> to vector<8x1xf32>
    %cst_18 = arith.constant 6.400000e+01 : f32
    %40 = vector.broadcast %cst_18 : f32 to vector<8x1xf32>
    %41 = arith.divf %39, %40 : vector<8x1xf32>
    %42 = vector.broadcast %34 : vector<8x1xf32> to vector<8x64xf32>
    %43 = arith.subf %30, %42 : vector<8x64xf32>
    %cst_19 = arith.constant 9.99999974E-6 : f32
    %44 = vector.broadcast %cst_19 : f32 to vector<8x1xf32>
    %45 = arith.addf %41, %44 : vector<8x1xf32>
    %46 = math.rsqrt %45 : vector<8x1xf32>
    %47 = vector.broadcast %46 : vector<8x1xf32> to vector<8x64xf32>
    %48 = arith.mulf %43, %47 : vector<8x64xf32>
    %c0_20 = arith.constant 0 : index
    %c0_21 = arith.constant 0 : index
    %49 = vector.load %arg4[%c0_20, %c0_21] : memref<1x64xf32, #tpu.memory_space<vmem>>, vector<1x64xf32>
    %50 = vector.broadcast %49 : vector<1x64xf32> to vector<8x64xf32>
    %51 = arith.mulf %48, %50 : vector<8x64xf32>
    %c0_22 = arith.constant 0 : index
    %c0_23 = arith.constant 0 : index
    %52 = vector.load %arg5[%c0_22, %c0_23] : memref<1x64xf32, #tpu.memory_space<vmem>>, vector<1x64xf32>
    %53 = vector.broadcast %52 : vector<1x64xf32> to vector<8x64xf32>
    %54 = arith.addf %51, %53 : vector<8x64xf32>
    %55 = math.tanh %54 : vector<8x64xf32>
    %cst_24 = arith.constant 0.000000e+00 : f32
    %56 = vector.broadcast %cst_24 : f32 to vector<8x64xf32>
    %57 = tpu.concatenate %55, %56 in 1 : vector<8x64xf32>, vector<8x64xf32> -> vector<8x128xf32>
    %cst_25 = arith.constant 1.000000e+00 : f32
    %58 = vector.broadcast %cst_25 : f32 to vector<8x128xf32>
    %cst_26 = arith.constant 4.000000e+00 : f32
    %59 = vector.broadcast %cst_26 : f32 to vector<8x128xf32>
    %60 = arith.mulf %59, %57 : vector<8x128xf32>
    %cst_27 = arith.constant 0.000000e+00 : f32
    %61 = vector.broadcast %cst_27 : f32 to vector<8x128xf32>
    %62 = arith.addf %61, %60 : vector<8x128xf32>
    %cst_28 = arith.constant 5.000000e-01 : f32
    %63 = vector.broadcast %cst_28 : f32 to vector<8x128xf32>
    %64 = arith.mulf %62, %63 : vector<8x128xf32>
    %cst_29 = arith.constant 1.875000e+00 : f32
    %65 = vector.broadcast %cst_29 : f32 to vector<8x128xf32>
    %66 = arith.mulf %65, %57 : vector<8x128xf32>
    %cst_30 = arith.constant 0.000000e+00 : f32
    %67 = vector.broadcast %cst_30 : f32 to vector<8x128xf32>
    %68 = arith.addf %66, %67 : vector<8x128xf32>
    %69 = arith.mulf %68, %64 : vector<8x128xf32>
    %cst_31 = arith.constant 7.500000e-01 : f32
    %70 = vector.broadcast %cst_31 : f32 to vector<8x128xf32>
    %71 = arith.mulf %70, %58 : vector<8x128xf32>
    %72 = arith.subf %69, %71 : vector<8x128xf32>
    %cst_32 = arith.constant 1.86666667 : f32
    %73 = vector.broadcast %cst_32 : f32 to vector<8x128xf32>
    %74 = arith.mulf %73, %57 : vector<8x128xf32>
    %cst_33 = arith.constant 0.000000e+00 : f32
    %75 = vector.broadcast %cst_33 : f32 to vector<8x128xf32>
    %76 = arith.addf %74, %75 : vector<8x128xf32>
    %77 = arith.mulf %76, %72 : vector<8x128xf32>
    %cst_34 = arith.constant 8.000000e-01 : f32
    %78 = vector.broadcast %cst_34 : f32 to vector<8x128xf32>
    %79 = arith.mulf %78, %64 : vector<8x128xf32>
    %80 = arith.subf %77, %79 : vector<8x128xf32>
    %81 = tpu.concatenate %64, %72, %80 in 1 : vector<8x128xf32>, vector<8x128xf32>, vector<8x128xf32> -> vector<8x384xf32>
    %c0_35 = arith.constant 0 : index
    %c0_36 = arith.constant 0 : index
    %82 = vector.load %arg6[%c0_35, %c0_36] : memref<384x32xf32, #tpu.memory_space<vmem>>, vector<384x32xf32>
    %cst_37 = arith.constant dense<0.000000e+00> : vector<8x32xf32>
    %83 = tpu.matmul %81, %82, %cst_37 {dimension_numbers = #tpu.dot_dimension_numbers<[1], [0], [0], [1], [0, 0, 1, 1], [], []>} : vector<8x384xf32>, vector<384x32xf32>, vector<8x32xf32> -> vector<8x32xf32>
    %c0_38 = arith.constant 0 : index
    %c0_39 = arith.constant 0 : index
    %84 = vector.load %arg7[%c0_38, %c0_39] : memref<1x32xf32, #tpu.memory_space<vmem>>, vector<1x32xf32>
    %85 = vector.broadcast %84 : vector<1x32xf32> to vector<8x32xf32>
    %86 = arith.addf %83, %85 : vector<8x32xf32>
    %cst_40 = arith.constant dense<0.000000e+00> : vector<8xf32>
    %87 = vector.multi_reduction <add>, %86, %cst_40 [1] : vector<8x32xf32> to vector<8xf32>
    %88 = vector.shape_cast %87 : vector<8xf32> to vector<8x1xf32>
    %cst_41 = arith.constant 3.200000e+01 : f32
    %89 = vector.broadcast %cst_41 : f32 to vector<8x1xf32>
    %90 = arith.divf %88, %89 : vector<8x1xf32>
    %91 = vector.broadcast %90 : vector<8x1xf32> to vector<8x32xf32>
    %92 = arith.subf %86, %91 : vector<8x32xf32>
    %93 = arith.mulf %92, %92 : vector<8x32xf32>
    %cst_42 = arith.constant dense<0.000000e+00> : vector<8xf32>
    %94 = vector.multi_reduction <add>, %93, %cst_42 [1] : vector<8x32xf32> to vector<8xf32>
    %95 = vector.shape_cast %94 : vector<8xf32> to vector<8x1xf32>
    %cst_43 = arith.constant 3.200000e+01 : f32
    %96 = vector.broadcast %cst_43 : f32 to vector<8x1xf32>
    %97 = arith.divf %95, %96 : vector<8x1xf32>
    %98 = vector.broadcast %90 : vector<8x1xf32> to vector<8x32xf32>
    %99 = arith.subf %86, %98 : vector<8x32xf32>
    %cst_44 = arith.constant 9.99999974E-6 : f32
    %100 = vector.broadcast %cst_44 : f32 to vector<8x1xf32>
    %101 = arith.addf %97, %100 : vector<8x1xf32>
    %102 = math.rsqrt %101 : vector<8x1xf32>
    %103 = vector.broadcast %102 : vector<8x1xf32> to vector<8x32xf32>
    %104 = arith.mulf %99, %103 : vector<8x32xf32>
    %c0_45 = arith.constant 0 : index
    %c0_46 = arith.constant 0 : index
    %105 = vector.load %arg8[%c0_45, %c0_46] : memref<1x32xf32, #tpu.memory_space<vmem>>, vector<1x32xf32>
    %106 = vector.broadcast %105 : vector<1x32xf32> to vector<8x32xf32>
    %107 = arith.mulf %104, %106 : vector<8x32xf32>
    %c0_47 = arith.constant 0 : index
    %c0_48 = arith.constant 0 : index
    %108 = vector.load %arg9[%c0_47, %c0_48] : memref<1x32xf32, #tpu.memory_space<vmem>>, vector<1x32xf32>
    %109 = vector.broadcast %108 : vector<1x32xf32> to vector<8x32xf32>
    %110 = arith.addf %107, %109 : vector<8x32xf32>
    %cst_49 = arith.constant 0.000000e+00 : f32
    %111 = vector.broadcast %cst_49 : f32 to vector<8x96xf32>
    %112 = tpu.concatenate %110, %111 in 1 : vector<8x32xf32>, vector<8x96xf32> -> vector<8x128xf32>
    %c0_50 = arith.constant 0 : index
    %c0_51 = arith.constant 0 : index
    %113 = vector.load %arg10[%c0_50, %c0_51] : memref<8x128xf32, #tpu.memory_space<vmem>>, vector<8x128xf32>
    tpu.vector_store %arg10[%c0_50, %c0_51], %112 {strides = array<i32>} : memref<8x128xf32, #tpu.memory_space<vmem>>, vector<8x128xf32>,
    return
  }
  func.func @transform_0(%arg0: i32) -> (i32, i32) {
    %c0_i32 = arith.constant 0 : i32
    %c0_i32_0 = arith.constant 0 : i32
    return %arg0, %c0_i32 : i32, i32
  }
  func.func @transform_1(%arg0: i32) -> (i32, i32) {
    %c0_i32 = arith.constant 0 : i32
    %c0_i32_0 = arith.constant 0 : i32
    %c0_i32_1 = arith.constant 0 : i32
    return %c0_i32, %c0_i32_0 : i32, i32
  }
  func.func @transform_2(%arg0: i32) -> (i32, i32) {
    %c0_i32 = arith.constant 0 : i32
    %c0_i32_0 = arith.constant 0 : i32
    %c0_i32_1 = arith.constant 0 : i32
    return %c0_i32, %c0_i32_0 : i32, i32
  }
  func.func @transform_3(%arg0: i32) -> (i32, i32) {
    %c0_i32 = arith.constant 0 : i32
    %c0_i32_0 = arith.constant 0 : i32
    %c0_i32_1 = arith.constant 0 : i32
    return %c0_i32, %c0_i32_0 : i32, i32
  }
  func.func @transform_4(%arg0: i32) -> (i32, i32) {
    %c0_i32 = arith.constant 0 : i32
    %c0_i32_0 = arith.constant 0 : i32
    %c0_i32_1 = arith.constant 0 : i32
    return %c0_i32, %c0_i32_0 : i32, i32
  }
  func.func @transform_5(%arg0: i32) -> (i32, i32) {
    %c0_i32 = arith.constant 0 : i32
    %c0_i32_0 = arith.constant 0 : i32
    %c0_i32_1 = arith.constant 0 : i32
    return %c0_i32, %c0_i32_0 : i32, i32
  }
  func.func @transform_6(%arg0: i32) -> (i32, i32) {
    %c0_i32 = arith.constant 0 : i32
    %c0_i32_0 = arith.constant 0 : i32
    %c0_i32_1 = arith.constant 0 : i32
    return %c0_i32, %c0_i32_0 : i32, i32
  }
  func.func @transform_7(%arg0: i32) -> (i32, i32) {
    %c0_i32 = arith.constant 0 : i32
    %c0_i32_0 = arith.constant 0 : i32
    %c0_i32_1 = arith.constant 0 : i32
    return %c0_i32, %c0_i32_0 : i32, i32
  }
  func.func @transform_8(%arg0: i32) -> (i32, i32) {
    %c0_i32 = arith.constant 0 : i32
    %c0_i32_0 = arith.constant 0 : i32
    %c0_i32_1 = arith.constant 0 : i32
    return %c0_i32, %c0_i32_0 : i32, i32
  }
  func.func @transform_9(%arg0: i32) -> (i32, i32) {
    %c0_i32 = arith.constant 0 : i32
    %c0_i32_0 = arith.constant 0 : i32
    return %arg0, %c0_i32 : i32, i32
  }
}

module attributes {stable_mosaic.version = 11 : i64} {
  func.func @_jacobi_kan_fused_kernel(%arg0: i32, %arg1: memref<8x128xf32, #tpu.memory_space<vmem>>, %arg2: memref<384x64xf32, #tpu.memory_space<vmem>>, %arg3: memref<1x64xf32, #tpu.memory_space<vmem>>, %arg4: memref<1x64xf32, #tpu.memory_space<vmem>>, %arg5: memref<1x64xf32, #tpu.memory_space<vmem>>, %arg6: memref<384x32xf32, #tpu.memory_space<vmem>>, %arg7: memref<1x32xf32, #tpu.memory_space<vmem>>, %arg8: memref<1x32xf32, #tpu.memory_space<vmem>>, %arg9: memref<1x32xf32, #tpu.memory_space<vmem>>, %arg10: memref<8x128xf32, #tpu.memory_space<vmem>>) attributes {dimension_semantics = [#tpu.dimension_semantics<parallel>], iteration_bounds = array<i64: 2>, scalar_prefetch = 0 : i64, scratch_operands = 0 : i64, tpu.core_type = #tpu.core_type<tc>, window_params = [{transform_indices = @transform_0, window_bounds = array<i64: 8, 128>}, {pipeline_mode = #tpu.pipeline_mode<synchronous>, transform_indices = @transform_1, window_bounds = array<i64: 384, 64>}, {pipeline_mode = #tpu.pipeline_mode<synchronous>, transform_indices = @transform_2, window_bounds = array<i64: 1, 64>}, {pipeline_mode = #tpu.pipeline_mode<synchronous>, transform_indices = @transform_3, window_bounds = array<i64: 1, 64>}, {pipeline_mode = #tpu.pipeline_mode<synchronous>, transform_indices = @transform_4, window_bounds = array<i64: 1, 64>}, {pipeline_mode = #tpu.pipeline_mode<synchronous>, transform_indices = @transform_5, window_bounds = array<i64: 384, 32>}, {pipeline_mode = #tpu.pipeline_mode<synchronous>, transform_indices = @transform_6, window_bounds = array<i64: 1, 32>}, {pipeline_mode = #tpu.pipeline_mode<synchronous>, transform_indices = @transform_7, window_bounds = array<i64: 1, 32>}, {pipeline_mode = #tpu.pipeline_mode<synchronous>, transform_indices = @transform_8, window_bounds = array<i64: 1, 32>}, {transform_indices = @transform_9, window_bounds = array<i64: 8, 128>}]} {
    %c0 = arith.constant 0 : index
    %c0_0 = arith.constant 0 : index
    %0 = vector.load %arg1[%c0, %c0_0] : memref<8x128xf32, #tpu.memory_space<vmem>>, vector<8x128xf32>
    %1 = math.tanh %0 : vector<8x128xf32>
    %cst = arith.constant 1.000000e+00 : f32
    %2 = vector.broadcast %cst : f32 to vector<8x128xf32>
    %cst_1 = arith.constant 4.000000e+00 : f32
    %3 = vector.broadcast %cst_1 : f32 to vector<8x128xf32>
    %4 = arith.mulf %3, %1 : vector<8x128xf32>
    %cst_2 = arith.constant 0.000000e+00 : f32
    %5 = vector.broadcast %cst_2 : f32 to vector<8x128xf32>
    %6 = arith.addf %5, %4 : vector<8x128xf32>
    %cst_3 = arith.constant 5.000000e-01 : f32
    %7 = vector.broadcast %cst_3 : f32 to vector<8x128xf32>
    %8 = arith.mulf %6, %7 : vector<8x128xf32>
    %cst_4 = arith.constant 1.875000e+00 : f32
    %9 = vector.broadcast %cst_4 : f32 to vector<8x128xf32>
    %10 = arith.mulf %9, %1 : vector<8x128xf32>
    %cst_5 = arith.constant 0.000000e+00 : f32
    %11 = vector.broadcast %cst_5 : f32 to vector<8x128xf32>
    %12 = arith.addf %10, %11 : vector<8x128xf32>
    %13 = arith.mulf %12, %8 : vector<8x128xf32>
    %cst_6 = arith.constant 7.500000e-01 : f32
    %14 = vector.broadcast %cst_6 : f32 to vector<8x128xf32>
    %15 = arith.mulf %14, %2 : vector<8x128xf32>
    %16 = arith.subf %13, %15 : vector<8x128xf32>
    %cst_7 = arith.constant 1.86666667 : f32
    %17 = vector.broadcast %cst_7 : f32 to vector<8x128xf32>
    %18 = arith.mulf %17, %1 : vector<8x128xf32>
    %cst_8 = arith.constant 0.000000e+00 : f32
    %19 = vector.broadcast %cst_8 : f32 to vector<8x128xf32>
    %20 = arith.addf %18, %19 : vector<8x128xf32>
    %21 = arith.mulf %20, %16 : vector<8x128xf32>
    %cst_9 = arith.constant 8.000000e-01 : f32
    %22 = vector.broadcast %cst_9 : f32 to vector<8x128xf32>
    %23 = arith.mulf %22, %8 : vector<8x128xf32>
    %24 = arith.subf %21, %23 : vector<8x128xf32>
    %25 = tpu.concatenate %8, %16, %24 in 1 : vector<8x128xf32>, vector<8x128xf32>, vector<8x128xf32> -> vector<8x384xf32>
    %c0_10 = arith.constant 0 : index
    %c0_11 = arith.constant 0 : index
    %26 = vector.load %arg2[%c0_10, %c0_11] : memref<384x64xf32, #tpu.memory_space<vmem>>, vector<384x64xf32>
    %cst_12 = arith.constant dense<0.000000e+00> : vector<8x64xf32>
    %27 = tpu.matmul %25, %26, %cst_12 {dimension_numbers = #tpu.dot_dimension_numbers<[1], [0], [0], [1], [0, 0, 1, 1], [], []>} : vector<8x384xf32>, vector<384x64xf32>, vector<8x64xf32> -> vector<8x64xf32>
    %c0_13 = arith.constant 0 : index
    %c0_14 = arith.constant 0 : index
    %28 = vector.load %arg3[%c0_13, %c0_14] : memref<1x64xf32, #tpu.memory_space<vmem>>, vector<1x64xf32>
    %29 = vector.broadcast %28 : vector<1x64xf32> to vector<8x64xf32>
    %30 = arith.addf %27, %29 : vector<8x64xf32>
    %cst_15 = arith.constant dense<0.000000e+00> : vector<8xf32>
    %31 = vector.multi_reduction <add>, %30, %cst_15 [1] : vector<8x64xf32> to vector<8xf32>
    %32 = vector.shape_cast %31 : vector<8xf32> to vector<8x1xf32>
    %cst_16 = arith.constant 6.400000e+01 : f32
    %33 = vector.broadcast %cst_16 : f32 to vector<8x1xf32>
    %34 = arith.divf %32, %33 : vector<8x1xf32>
    %35 = vector.broadcast %34 : vector<8x1xf32> to vector<8x64xf32>
    %36 = arith.subf %30, %35 : vector<8x64xf32>
    %37 = arith.mulf %36, %36 : vector<8x64xf32>
    %cst_17 = arith.constant dense<0.000000e+00> : vector<8xf32>
    %38 = vector.multi_reduction <add>, %37, %cst_17 [1] : vector<8x64xf32> to vector<8xf32>
    %39 = vector.shape_cast %38 : vector<8xf32> to vector<8x1xf32>
    %cst_18 = arith.constant 6.400000e+01 : f32
    %40 = vector.broadcast %cst_18 : f32 to vector<8x1xf32>
    %41 = arith.divf %39, %40 : vector<8x1xf32>
    %42 = vector.broadcast %34 : vector<8x1xf32> to vector<8x64xf32>
    %43 = arith.subf %30, %42 : vector<8x64xf32>
    %cst_19 = arith.constant 9.99999974E-6 : f32
    %44 = vector.broadcast %cst_19 : f32 to vector<8x1xf32>
    %45 = arith.addf %41, %44 : vector<8x1xf32>
    %46 = math.rsqrt %45 : vector<8x1xf32>
    %47 = vector.broadcast %46 : vector<8x1xf32> to vector<8x64xf32>
    %48 = arith.mulf %43, %47 : vector<8x64xf32>
    %c0_20 = arith.constant 0 : index
    %c0_21 = arith.constant 0 : index
    %49 = vector.load %arg4[%c0_20, %c0_21] : memref<1x64xf32, #tpu.memory_space<vmem>>, vector<1x64xf32>
    %50 = vector.broadcast %49 : vector<1x64xf32> to vector<8x64xf32>
    %51 = arith.mulf %48, %50 : vector<8x64xf32>
    %c0_22 = arith.constant 0 : index
    %c0_23 = arith.constant 0 : index
    %52 = vector.load %arg5[%c0_22, %c0_23] : memref<1x64xf32, #tpu.memory_space<vmem>>, vector<1x64xf32>
    %53 = vector.broadcast %52 : vector<1x64xf32> to vector<8x64xf32>
    %54 = arith.addf %51, %53 : vector<8x64xf32>
    %55 = math.tanh %54 : vector<8x64xf32>
    %cst_24 = arith.constant 0.000000e+00 : f32
    %56 = vector.broadcast %cst_24 : f32 to vector<8x64xf32>
    %57 = tpu.concatenate %55, %56 in 1 : vector<8x64xf32>, vector<8x64xf32> -> vector<8x128xf32>
    %cst_25 = arith.constant 1.000000e+00 : f32
    %58 = vector.broadcast %cst_25 : f32 to vector<8x128xf32>
    %cst_26 = arith.constant 4.000000e+00 : f32
    %59 = vector.broadcast %cst_26 : f32 to vector<8x128xf32>
    %60 = arith.mulf %59, %57 : vector<8x128xf32>
    %cst_27 = arith.constant 0.000000e+00 : f32
    %61 = vector.broadcast %cst_27 : f32 to vector<8x128xf32>
    %62 = arith.addf %61, %60 : vector<8x128xf32>
    %cst_28 = arith.constant 5.000000e-01 : f32
    %63 = vector.broadcast %cst_28 : f32 to vector<8x128xf32>
    %64 = arith.mulf %62, %63 : vector<8x128xf32>
    %cst_29 = arith.constant 1.875000e+00 : f32
    %65 = vector.broadcast %cst_29 : f32 to vector<8x128xf32>
    %66 = arith.mulf %65, %57 : vector<8x128xf32>
    %cst_30 = arith.constant 0.000000e+00 : f32
    %67 = vector.broadcast %cst_30 : f32 to vector<8x128xf32>
    %68 = arith.addf %66, %67 : vector<8x128xf32>
    %69 = arith.mulf %68, %64 : vector<8x128xf32>
    %cst_31 = arith.constant 7.500000e-01 : f32
    %70 = vector.broadcast %cst_31 : f32 to vector<8x128xf32>
    %71 = arith.mulf %70, %58 : vector<8x128xf32>
    %72 = arith.subf %69, %71 : vector<8x128xf32>
    %cst_32 = arith.constant 1.86666667 : f32
    %73 = vector.broadcast %cst_32 : f32 to vector<8x128xf32>
    %74 = arith.mulf %73, %57 : vector<8x128xf32>
    %cst_33 = arith.constant 0.000000e+00 : f32
    %75 = vector.broadcast %cst_33 : f32 to vector<8x128xf32>
    %76 = arith.addf %74, %75 : vector<8x128xf32>
    %77 = arith.mulf %76, %72 : vector<8x128xf32>
    %cst_34 = arith.constant 8.000000e-01 : f32
    %78 = vector.broadcast %cst_34 : f32 to vector<8x128xf32>
    %79 = arith.mulf %78, %64 : vector<8x128xf32>
    %80 = arith.subf %77, %79 : vector<8x128xf32>
    %81 = tpu.concatenate %64, %72, %80 in 1 : vector<8x128xf32>, vector<8x128xf32>, vector<8x128xf32> -> vector<8x384xf32>
    %c0_35 = arith.constant 0 : index
    %c0_36 = arith.constant 0 : index
    %82 = vector.load %arg6[%c0_35, %c0_36] : memref<384x32xf32, #tpu.memory_space<vmem>>, vector<384x32xf32>
    %cst_37 = arith.constant dense<0.000000e+00> : vector<8x32xf32>
    %83 = tpu.matmul %81, %82, %cst_37 {dimension_numbers = #tpu.dot_dimension_numbers<[1], [0], [0], [1], [0, 0, 1, 1], [], []>} : vector<8x384xf32>, vector<384x32xf32>, vector<8x32xf32> -> vector<8x32xf32>
    %c0_38 = arith.constant 0 : index
    %c0_39 = arith.constant 0 : index
    %84 = vector.load %arg7[%c0_38, %c0_39] : memref<1x32xf32, #tpu.memory_space<vmem>>, vector<1x32xf32>
    %85 = vector.broadcast %84 : vector<1x32xf32> to vector<8x32xf32>
    %86 = arith.addf %83, %85 : vector<8x32xf32>
    %cst_40 = arith.constant dense<0.000000e+00> : vector<8xf32>
    %87 = vector.multi_reduction <add>, %86, %cst_40 [1] : vector<8x32xf32> to vector<8xf32>
    %88 = vector.shape_cast %87 : vector<8xf32> to vector<8x1xf32>
    %cst_41 = arith.constant 3.200000e+01 : f32
    %89 = vector.broadcast %cst_41 : f32 to vector<8x1xf32>
    %90 = arith.divf %88, %89 : vector<8x1xf32>
    %91 = vector.broadcast %90 : vector<8x1xf32> to vector<8x32xf32>
    %92 = arith.subf %86, %91 : vector<8x32xf32>
    %93 = arith.mulf %92, %92 : vector<8x32xf32>
    %cst_42 = arith.constant dense<0.000000e+00> : vector<8xf32>
    %94 = vector.multi_reduction <add>, %93, %cst_42 [1] : vector<8x32xf32> to vector<8xf32>
    %95 = vector.shape_cast %94 : vector<8xf32> to vector<8x1xf32>
    %cst_43 = arith.constant 3.200000e+01 : f32
    %96 = vector.broadcast %cst_43 : f32 to vector<8x1xf32>
    %97 = arith.divf %95, %96 : vector<8x1xf32>
    %98 = vector.broadcast %90 : vector<8x1xf32> to vector<8x32xf32>
    %99 = arith.subf %86, %98 : vector<8x32xf32>
    %cst_44 = arith.constant 9.99999974E-6 : f32
    %100 = vector.broadcast %cst_44 : f32 to vector<8x1xf32>
    %101 = arith.addf %97, %100 : vector<8x1xf32>
    %102 = math.rsqrt %101 : vector<8x1xf32>
    %103 = vector.broadcast %102 : vector<8x1xf32> to vector<8x32xf32>
    %104 = arith.mulf %99, %103 : vector<8x32xf32>
    %c0_45 = arith.constant 0 : index
    %c0_46 = arith.constant 0 : index
    %105 = vector.load %arg8[%c0_45, %c0_46] : memref<1x32xf32, #tpu.memory_space<vmem>>, vector<1x32xf32>
    %106 = vector.broadcast %105 : vector<1x32xf32> to vector<8x32xf32>
    %107 = arith.mulf %104, %106 : vector<8x32xf32>
    %c0_47 = arith.constant 0 : index
    %c0_48 = arith.constant 0 : index
    %108 = vector.load %arg9[%c0_47, %c0_48] : memref<1x32xf32, #tpu.memory_space<vmem>>, vector<1x32xf32>
    %109 = vector.broadcast %108 : vector<1x32xf32> to vector<8x32xf32>
    %110 = arith.addf %107, %109 : vector<8x32xf32>
    %cst_49 = arith.constant 0.000000e+00 : f32
    %111 = vector.broadcast %cst_49 : f32 to vector<8x96xf32>
    %112 = tpu.concatenate %110, %111 in 1 : vector<8x32xf32>, vector<8x96xf32> -> vector<8x128xf32>
    %c0_50 = arith.constant 0 : index
    %c0_51 = arith.constant 0 : index
    %113 = vector.load %arg10[%c0_50, %c0_51] : memref<8x128xf32, #tpu.memory_space<vmem>>, vector<8x128xf32>
    tpu.vector_store %arg10[%c0_50, %c0_51], %112 {strides = array<i32>} : memref<8x128xf32, #tpu.memory_space<vmem>>, vector<8x128xf32>,
    return
  }
  func.func @transform_0(%arg0: i32) -> (i32, i32) {
    %c0_i32 = arith.constant 0 : i32
    %c0_i32_0 = arith.constant 0 : i32
    return %arg0, %c0_i32 : i32, i32
  }
  func.func @transform_1(%arg0: i32) -> (i32, i32) {
    %c0_i32 = arith.constant 0 : i32
    %c0_i32_0 = arith.constant 0 : i32
    %c0_i32_1 = arith.constant 0 : i32
    return %c0_i32, %c0_i32_0 : i32, i32
  }
  func.func @transform_2(%arg0: i32) -> (i32, i32) {
    %c0_i32 = arith.constant 0 : i32
    %c0_i32_0 = arith.constant 0 : i32
    %c0_i32_1 = arith.constant 0 : i32
    return %c0_i32, %c0_i32_0 : i32, i32
  }
  func.func @transform_3(%arg0: i32) -> (i32, i32) {
    %c0_i32 = arith.constant 0 : i32
    %c0_i32_0 = arith.constant 0 : i32
    %c0_i32_1 = arith.constant 0 : i32
    return %c0_i32, %c0_i32_0 : i32, i32
  }
  func.func @transform_4(%arg0: i32) -> (i32, i32) {
    %c0_i32 = arith.constant 0 : i32
    %c0_i32_0 = arith.constant 0 : i32
    %c0_i32_1 = arith.constant 0 : i32
    return %c0_i32, %c0_i32_0 : i32, i32
  }
  func.func @transform_5(%arg0: i32) -> (i32, i32) {
    %c0_i32 = arith.constant 0 : i32
    %c0_i32_0 = arith.constant 0 : i32
    %c0_i32_1 = arith.constant 0 : i32
    return %c0_i32, %c0_i32_0 : i32, i32
  }
  func.func @transform_6(%arg0: i32) -> (i32, i32) {
    %c0_i32 = arith.constant 0 : i32
    %c0_i32_0 = arith.constant 0 : i32
    %c0_i32_1 = arith.constant 0 : i32
    return %c0_i32, %c0_i32_0 : i32, i32
  }
  func.func @transform_7(%arg0: i32) -> (i32, i32) {
    %c0_i32 = arith.constant 0 : i32
    %c0_i32_0 = arith.constant 0 : i32
    %c0_i32_1 = arith.constant 0 : i32
    return %c0_i32, %c0_i32_0 : i32, i32
  }
  func.func @transform_8(%arg0: i32) -> (i32, i32) {
    %c0_i32 = arith.constant 0 : i32
    %c0_i32_0 = arith.constant 0 : i32
    %c0_i32_1 = arith.constant 0 : i32
    return %c0_i32, %c0_i32_0 : i32, i32
  }
  func.func @transform_9(%arg0: i32) -> (i32, i32) {
    %c0_i32 = arith.constant 0 : i32
    %c0_i32_0 = arith.constant 0 : i32
    return %arg0, %c0_i32 : i32, i32
  }
}

</mosaic_0001>

<llo_original>
// kernel: tpu_custom_call.1
$region0: #{tpu_custom_call.1}
  #allocation0 [shape = 'u32[]', space=smem, size = 0x4, offset = 0x4, fixed_abs, tag = 'smem constant byte address 0x4 - core index']
  #allocation1 [shape = 'u32[72,128]{1,0:T(1,128)}', space=vmem, size = 0x9000, scoped, tag = 'internal scratch']
  %s0 = inlined_call_operand.vmem [shape: f32[16,128], index: 0, kind: input, shape index: {}]
  %s1 = inlined_call_operand.vmem [shape: f32[384,64], index: 1, kind: input, shape index: {}]
  %s2 = inlined_call_operand.vmem [shape: f32[1,64], index: 2, kind: input, shape index: {}]
  %s3 = inlined_call_operand.vmem [shape: f32[1,64], index: 3, kind: input, shape index: {}]
  %s4 = inlined_call_operand.vmem [shape: f32[1,64], index: 4, kind: input, shape index: {}]
  %s5 = inlined_call_operand.vmem [shape: f32[384,32], index: 5, kind: input, shape index: {}]
  %s6 = inlined_call_operand.vmem [shape: f32[1,32], index: 6, kind: input, shape index: {}]
  %s7 = inlined_call_operand.vmem [shape: f32[1,32], index: 7, kind: input, shape index: {}]
  %s8 = inlined_call_operand.vmem [shape: f32[1,32], index: 8, kind: input, shape index: {}]
  %s9 = inlined_call_operand.hbm [shape: f32[16,128], index: 9, kind: output, shape index: {}]
  %s10 = sld [smem:[#allocation0]]
  $region69: #{tpu_custom_call.1} parent=0
    _
  %s12 = ssub.s32 1, %s10
  %s13 = scalar_select 0, %s12, %s10
  $region1: #{tpu_custom_call.1} parent=0
    #allocation2 [shape = 'u8[8192]{0}', space=vmem, size = 0x2000, scoped, tag = 'output window, operand 0']
    #allocation3 [shape = 's32[2]{0}', space=sflag, size = 0x8, scoped, tag = 'scoped memory for tpu_custom_call.1']
    %14 = vsyncpa [#allocation3], 0
    %s15 = scalar_lea.sflag [#allocation3], 1
    %16 = vsyncpa %s15, 0
    loop: start=0, step=1, limit=4
    $region2: #{tpu_custom_call.1} parent=1 // loop_pre_header
      _
    $region3: #{tpu_custom_call.1} parent=1 // loop_header
      %s18 = sphi 0, %s22
      %p19 = scmp.ge.s32.totalorder %s18, 4
      %s28 = sphi 0, %s30
      %s31 = sphi 0, %s28
      %s32 = sphi 0, %s31
      %s48 = sphi 0, %s32
      %s52 = sphi 0, %s52
      %s54 = sphi 0, %s52
      %s55 = sphi 0, %s54
      %s69 = sphi 0, %s55
      %s73 = sphi 0, %s73
      %s75 = sphi 0, %s73
      %s76 = sphi 0, %s75
      %s90 = sphi 0, %s76
      %s94 = sphi 0, %s94
      %s96 = sphi 0, %s94
      %s97 = sphi 0, %s96
      %s111 = sphi 0, %s97
      %s115 = sphi 0, %s115
      %s117 = sphi 0, %s115
      %s118 = sphi 0, %s117
      %s132 = sphi 0, %s118
      %s136 = sphi 0, %s136
      %s138 = sphi 0, %s136
      %s139 = sphi 0, %s138
      %s153 = sphi 0, %s139
      %s157 = sphi 0, %s157
      %s159 = sphi 0, %s157
      %s160 = sphi 0, %s159
      %s174 = sphi 0, %s160
      %s178 = sphi 0, %s178
      %s180 = sphi 0, %s178
      %s181 = sphi 0, %s180
      %s195 = sphi 0, %s181
      %s199 = sphi 0, %s199
      %s201 = sphi 0, %s199
      %s202 = sphi 0, %s201
      %s216 = sphi 0, %s202
      %s222 = sphi 0, %s224
      %s225 = sphi 0, %s222
      %s226 = sphi 0, %s225
      %s242 = sphi 0, %s226
    $region4: #{tpu_custom_call.1} parent=1 // loop_header_branch
      %21 = sbr.rel (%p19) target = $region8
    $region5: #{tpu_custom_call.1} parent=1 // loop_body
      %s23 = ssub.s32 %s18, 1
      %s24 = ssub.s32 %s18, 2
      %s25 = sadd.s32 %s18, 1
      %s26 = ssub.s32 %s18, %s25
      %p27 = scmp.eq.s32.totalorder %s26, 0
      %s29 = sadd.s32 %s28, 1
      %s30 = scalar_select %p27, %s28, %s29
      %p33 = pneg %p27
      %p34 = scmp.eq.s32.totalorder %s18, 1
      %p35 = por %p33, %p34
      %p36 = scmp.ne.s32.totalorder %s28, %s31
      %p37 = scmp.eq.s32.totalorder %s18, 0
      %p38 = por %p36, %p37
      %p39 = scmp.ne.s32.totalorder %s28, %s31
      %p40 = scmp.eq.s32.totalorder %s23, 1
      %p41 = por %p39, %p40
      %p42 = scmp.ne.s32.totalorder %s31, %s32
      %p43 = scmp.eq.s32.totalorder %s23, 0
      %p44 = por %p42, %p43
      %p45 = scmp.ne.s32.totalorder %s31, %s32
      %p46 = scmp.eq.s32.totalorder %s24, 1
      %p47 = por %p45, %p46
      %p49 = scmp.ne.s32.totalorder %s32, %s48
      %p50 = scmp.eq.s32.totalorder %s24, 0
      %p51 = por %p49, %p50
      %s53 = sadd.s32 %s52, 1
      %p56 = scmp.eq.s32.totalorder %s18, 1
      %p57 = scmp.ne.s32.totalorder %s52, %s54
      %p58 = scmp.eq.s32.totalorder %s18, 0
      %p59 = por %p57, %p58
      %p60 = scmp.ne.s32.totalorder %s52, %s54
      %p61 = scmp.eq.s32.totalorder %s23, 1
      %p62 = por %p60, %p61
      %p63 = scmp.ne.s32.totalorder %s54, %s55
      %p64 = scmp.eq.s32.totalorder %s23, 0
      %p65 = por %p63, %p64
      %p66 = scmp.ne.s32.totalorder %s54, %s55
      %p67 = scmp.eq.s32.totalorder %s24, 1
      %p68 = por %p66, %p67
      %p70 = scmp.ne.s32.totalorder %s55, %s69
      %p71 = scmp.eq.s32.totalorder %s24, 0
      %p72 = por %p70, %p71
      %s74 = sadd.s32 %s73, 1
      %p77 = scmp.eq.s32.totalorder %s18, 1
      %p78 = scmp.ne.s32.totalorder %s73, %s75
      %p79 = scmp.eq.s32.totalorder %s18, 0
      %p80 = por %p78, %p79
      %p81 = scmp.ne.s32.totalorder %s73, %s75
      %p82 = scmp.eq.s32.totalorder %s23, 1
      %p83 = por %p81, %p82
      %p84 = scmp.ne.s32.totalorder %s75, %s76
      %p85 = scmp.eq.s32.totalorder %s23, 0
      %p86 = por %p84, %p85
      %p87 = scmp.ne.s32.totalorder %s75, %s76
      %p88 = scmp.eq.s32.totalorder %s24, 1
      %p89 = por %p87, %p88
      %p91 = scmp.ne.s32.totalorder %s76, %s90
      %p92 = scmp.eq.s32.totalorder %s24, 0
      %p93 = por %p91, %p92
      %s95 = sadd.s32 %s94, 1
      %p98 = scmp.eq.s32.totalorder %s18, 1
      %p99 = scmp.ne.s32.totalorder %s94, %s96
      %p100 = scmp.eq.s32.totalorder %s18, 0
      %p101 = por %p99, %p100
      %p102 = scmp.ne.s32.totalorder %s94, %s96
      %p103 = scmp.eq.s32.totalorder %s23, 1
      %p104 = por %p102, %p103
      %p105 = scmp.ne.s32.totalorder %s96, %s97
      %p106 = scmp.eq.s32.totalorder %s23, 0
      %p107 = por %p105, %p106
      %p108 = scmp.ne.s32.totalorder %s96, %s97
      %p109 = scmp.eq.s32.totalorder %s24, 1
      %p110 = por %p108, %p109
      %p112 = scmp.ne.s32.totalorder %s97, %s111
      %p113 = scmp.eq.s32.totalorder %s24, 0
      %p114 = por %p112, %p113
      %s116 = sadd.s32 %s115, 1
      %p119 = scmp.eq.s32.totalorder %s18, 1
      %p120 = scmp.ne.s32.totalorder %s115, %s117
      %p121 = scmp.eq.s32.totalorder %s18, 0
      %p122 = por %p120, %p121
      %p123 = scmp.ne.s32.totalorder %s115, %s117
      %p124 = scmp.eq.s32.totalorder %s23, 1
      %p125 = por %p123, %p124
      %p126 = scmp.ne.s32.totalorder %s117, %s118
      %p127 = scmp.eq.s32.totalorder %s23, 0
      %p128 = por %p126, %p127
      %p129 = scmp.ne.s32.totalorder %s117, %s118
      %p130 = scmp.eq.s32.totalorder %s24, 1
      %p131 = por %p129, %p130
      %p133 = scmp.ne.s32.totalorder %s118, %s132
      %p134 = scmp.eq.s32.totalorder %s24, 0
      %p135 = por %p133, %p134
      %s137 = sadd.s32 %s136, 1
      %p140 = scmp.eq.s32.totalorder %s18, 1
      %p141 = scmp.ne.s32.totalorder %s136, %s138
      %p142 = scmp.eq.s32.totalorder %s18, 0
      %p143 = por %p141, %p142
      %p144 = scmp.ne.s32.totalorder %s136, %s138
      %p145 = scmp.eq.s32.totalorder %s23, 1
      %p146 = por %p144, %p145
      %p147 = scmp.ne.s32.totalorder %s138, %s139
      %p148 = scmp.eq.s32.totalorder %s23, 0
      %p149 = por %p147, %p148
      %p150 = scmp.ne.s32.totalorder %s138, %s139
      %p151 = scmp.eq.s32.totalorder %s24, 1
      %p152 = por %p150, %p151
      %p154 = scmp.ne.s32.totalorder %s139, %s153
      %p155 = scmp.eq.s32.totalorder %s24, 0
      %p156 = por %p154, %p155
      %s158 = sadd.s32 %s157, 1
      %p161 = scmp.eq.s32.totalorder %s18, 1
      %p162 = scmp.ne.s32.totalorder %s157, %s159
      %p163 = scmp.eq.s32.totalorder %s18, 0
      %p164 = por %p162, %p163
      %p165 = scmp.ne.s32.totalorder %s157, %s159
      %p166 = scmp.eq.s32.totalorder %s23, 1
      %p167 = por %p165, %p166
      %p168 = scmp.ne.s32.totalorder %s159, %s160
      %p169 = scmp.eq.s32.totalorder %s23, 0
      %p170 = por %p168, %p169
      %p171 = scmp.ne.s32.totalorder %s159, %s160
      %p172 = scmp.eq.s32.totalorder %s24, 1
      %p173 = por %p171, %p172
      %p175 = scmp.ne.s32.totalorder %s160, %s174
      %p176 = scmp.eq.s32.totalorder %s24, 0
      %p177 = por %p175, %p176
      %s179 = sadd.s32 %s178, 1
      %p182 = scmp.eq.s32.totalorder %s18, 1
      %p183 = scmp.ne.s32.totalorder %s178, %s180
      %p184 = scmp.eq.s32.totalorder %s18, 0
      %p185 = por %p183, %p184
      %p186 = scmp.ne.s32.totalorder %s178, %s180
      %p187 = scmp.eq.s32.totalorder %s23, 1
      %p188 = por %p186, %p187
      %p189 = scmp.ne.s32.totalorder %s180, %s181
      %p190 = scmp.eq.s32.totalorder %s23, 0
      %p191 = por %p189, %p190
      %p192 = scmp.ne.s32.totalorder %s180, %s181
      %p193 = scmp.eq.s32.totalorder %s24, 1
      %p194 = por %p192, %p193
      %p196 = scmp.ne.s32.totalorder %s181, %s195
      %p197 = scmp.eq.s32.totalorder %s24, 0
      %p198 = por %p196, %p197
      %s200 = sadd.s32 %s199, 1
      %p203 = scmp.eq.s32.totalorder %s18, 1
      %p204 = scmp.ne.s32.totalorder %s199, %s201
      %p205 = scmp.eq.s32.totalorder %s18, 0
      %p206 = por %p204, %p205
      %p207 = scmp.ne.s32.totalorder %s199, %s201
      %p208 = scmp.eq.s32.totalorder %s23, 1
      %p209 = por %p207, %p208
      %p210 = scmp.ne.s32.totalorder %s201, %s202
      %p211 = scmp.eq.s32.totalorder %s23, 0
      %p212 = por %p210, %p211
      %p213 = scmp.ne.s32.totalorder %s201, %s202
      %p214 = scmp.eq.s32.totalorder %s24, 1
      %p215 = por %p213, %p214
      %p217 = scmp.ne.s32.totalorder %s202, %s216
      %p218 = scmp.eq.s32.totalorder %s24, 0
      %p219 = por %p217, %p218
      %s220 = ssub.s32 %s18, %s25
      %p221 = scmp.eq.s32.totalorder %s220, 0
      %s223 = sadd.s32 %s222, 1
      %s224 = scalar_select %p221, %s222, %s223
      %p227 = pneg %p221
      %p228 = scmp.eq.s32.totalorder %s18, 1
      %p229 = por %p227, %p228
      %p230 = scmp.ne.s32.totalorder %s222, %s225
      %p231 = scmp.eq.s32.totalorder %s18, 0
      %p232 = por %p230, %p231
      %p233 = scmp.ne.s32.totalorder %s222, %s225
      %p234 = scmp.eq.s32.totalorder %s23, 1
      %p235 = por %p233, %p234
      %p236 = scmp.ne.s32.totalorder %s225, %s226
      %p237 = scmp.eq.s32.totalorder %s23, 0
      %p238 = por %p236, %p237
      %p239 = scmp.ne.s32.totalorder %s225, %s226
      %p240 = scmp.eq.s32.totalorder %s24, 1
      %p241 = por %p239, %p240
      %p243 = scmp.ne.s32.totalorder %s226, %s242
      %p244 = scmp.eq.s32.totalorder %s24, 0
      %p245 = por %p243, %p244
      %p246 = scmp.le.s32.totalorder 1, %s18
      %p247 = scmp.lt.s32.totalorder %s18, 3
      %p248 = pnand %p246, %p247
      %p249 = pneg %p248
      // Predicated region
      $region9: #{tpu_custom_call.1} parent=5 // pred_check
        _
      $region10: #{tpu_custom_call.1} parent=5 // pred_check_branch
        %251 = sbr.rel (%p248) target = $region12
      $region11: #{tpu_custom_call.1} parent=5 // pred_region
        %s252 = ssub.s32 %s18, 1
        // Predicated region
        $region13: #{tpu_custom_call.1} parent=11 // pred_check
          %p253 = pneg %p65
        $region14: #{tpu_custom_call.1} parent=11 // pred_check_branch
          %255 = sbr.rel (%p253) target = $region16
        $region15: #{tpu_custom_call.1} parent=11 // pred_region
          _
        $region16: #{tpu_custom_call.1} parent=11 // pred_fallthru
          _
        // Predicated region
        $region17: #{tpu_custom_call.1} parent=11 // pred_check
          %p256 = pneg %p86
        $region18: #{tpu_custom_call.1} parent=11 // pred_check_branch
          %258 = sbr.rel (%p256) target = $region20
        $region19: #{tpu_custom_call.1} parent=11 // pred_region
          _
        $region20: #{tpu_custom_call.1} parent=11 // pred_fallthru
          _
        // Predicated region
        $region21: #{tpu_custom_call.1} parent=11 // pred_check
          %p259 = pneg %p107
        $region22: #{tpu_custom_call.1} parent=11 // pred_check_branch
          %261 = sbr.rel (%p259) target = $region24
        $region23: #{tpu_custom_call.1} parent=11 // pred_region
          _
        $region24: #{tpu_custom_call.1} parent=11 // pred_fallthru
          _
        // Predicated region
        $region25: #{tpu_custom_call.1} parent=11 // pred_check
          %p262 = pneg %p128
        $region26: #{tpu_custom_call.1} parent=11 // pred_check_branch
          %264 = sbr.rel (%p262) target = $region28
        $region27: #{tpu_custom_call.1} parent=11 // pred_region
          _
        $region28: #{tpu_custom_call.1} parent=11 // pred_fallthru
          _
        // Predicated region
        $region29: #{tpu_custom_call.1} parent=11 // pred_check
          %p265 = pneg %p149
        $region30: #{tpu_custom_call.1} parent=11 // pred_check_branch
          %267 = sbr.rel (%p265) target = $region32
        $region31: #{tpu_custom_call.1} parent=11 // pred_region
          _
        $region32: #{tpu_custom_call.1} parent=11 // pred_fallthru
          _
        // Predicated region
        $region33: #{tpu_custom_call.1} parent=11 // pred_check
          %p268 = pneg %p170
        $region34: #{tpu_custom_call.1} parent=11 // pred_check_branch
          %270 = sbr.rel (%p268) target = $region36
        $region35: #{tpu_custom_call.1} parent=11 // pred_region
          _
        $region36: #{tpu_custom_call.1} parent=11 // pred_fallthru
          _
        // Predicated region
        $region37: #{tpu_custom_call.1} parent=11 // pred_check
          %p271 = pneg %p191
        $region38: #{tpu_custom_call.1} parent=11 // pred_check_branch
          %273 = sbr.rel (%p271) target = $region40
        $region39: #{tpu_custom_call.1} parent=11 // pred_region
          _
        $region40: #{tpu_custom_call.1} parent=11 // pred_fallthru
          _
        // Predicated region
        $region41: #{tpu_custom_call.1} parent=11 // pred_check
          %p274 = pneg %p212
        $region42: #{tpu_custom_call.1} parent=11 // pred_check_branch
          %276 = sbr.rel (%p274) target = $region44
        $region43: #{tpu_custom_call.1} parent=11 // pred_region
          _
        $region44: #{tpu_custom_call.1} parent=11 // pred_fallthru
          _
      $region12: #{tpu_custom_call.1} parent=5 // pred_fallthru
        _
      %p277 = scmp.lt.s32.totalorder %s18, 2
      // Predicated region
      $region45: #{tpu_custom_call.1} parent=5 // pred_check
        %p278 = pneg %p277
      $region46: #{tpu_custom_call.1} parent=5 // pred_check_branch
        %280 = sbr.rel (%p278) target = $region48
      $region47: #{tpu_custom_call.1} parent=5 // pred_region
        // Predicated region
        $region49: #{tpu_custom_call.1} parent=47 // pred_check
          %p281 = pneg %p38
        $region50: #{tpu_custom_call.1} parent=47 // pred_check_branch
          %283 = sbr.rel (%p281) target = $region52
        $region51: #{tpu_custom_call.1} parent=47 // pred_region
          %p284 = scmp.lt.s32.totalorder %s18, 1
          %s285 = scalar_select %p284, %s18, 1
          %s286 = smul.addr %s285, 8
          %s287 = scalar_lea.vmem %s0, %s286
        $region52: #{tpu_custom_call.1} parent=47 // pred_fallthru
          _
      $region48: #{tpu_custom_call.1} parent=5 // pred_fallthru
        _
      %p288 = scmp.le.s32.totalorder 1, %s18
      %p289 = scmp.lt.s32.totalorder %s18, 3
      %p290 = pnand %p288, %p289
      %p291 = pneg %p290
      // Predicated region
      $region53: #{tpu_custom_call.1} parent=5 // pred_check
        _
      $region54: #{tpu_custom_call.1} parent=5 // pred_check_branch
        %293 = sbr.rel (%p290) target = $region56
      $region55: #{tpu_custom_call.1} parent=5 // pred_region
        %s294 = ssub.s32 %s18, 1
        %p295 = scmp.lt.s32.totalorder %s23, 1
        %s296 = scalar_select %p295, %s23, 1
        %s297 = smul.addr %s296, 8
        %s298 = scalar_lea.vmem %s0, %s297
        %p299 = pneg %p44
        %p300 = pneg %p41
        %p301 = pneg %p65
        %p302 = pneg %p62
        %p303 = pneg %p86
        %p304 = pneg %p83
        %p305 = pneg %p107
        %p306 = pneg %p104
        %p307 = pneg %p128
        %p308 = pneg %p125
        %p309 = pneg %p149
        %p310 = pneg %p146
        %p311 = pneg %p170
        %p312 = pneg %p167
        %p313 = pneg %p191
        %p314 = pneg %p188
        %p315 = pneg %p212
        %p316 = pneg %p209
        %p317 = pneg %p238
        %p318 = pneg %p235
        %s319 = sand.u32 %s225, 1
        %s320 = scalar_lea.sflag [#allocation3], %s319
        %s321 = sand.u32 %s225, 1
        %s322 = smul.addr %s321, 8
        %s323 = scalar_lea.vmem [#allocation2], %s322
        %p324 = scmp.lt.s32.totalorder %s23, 1
        %s325 = scalar_select %p324, %s23, 1
        %s326 = smul.addr %s325, 8
        %s327 = scalar_lea.vmem %s0, %s326
        %v328 = vld [vmem:[%s327] sm:$0xff]
        %v329 = vtanh.pop %v328
        %v330 = vmul.f32 %v329, 4.0
        %v331 = vadd.f32 %v330, 0.0
        %v332 = vmul.f32 %v331, 0.5
        %v333 = vmul.f32 %v329, 1.875
        %v334 = vadd.f32 %v333, 0.0
        %v335 = vmul.f32 %v334, %v332
        %v336 = vsub.f32 %v335, 0.75
        %v337 = vmul.f32 %v329, 1.8666667
        %v338 = vadd.f32 %v337, 0.0
        %v339 = vmul.f32 %v338, %v336
        %v340 = vmul.f32 %v332, 0.8
        %v341 = vsub.f32 %v339, %v340
        %v342 = vld [vmem:[%s1] sm:$0xff]
        %v343 = vld [vmem:[%s1 + $0x8] sm:$0xff]
        %v344 = vld [vmem:[%s1 + $0x10] sm:$0xff]
        %v345 = vld [vmem:[%s1 + $0x18] sm:$0xff]
        %v346 = vld [vmem:[%s1 + $0x20] sm:$0xff]
        %v347 = vld [vmem:[%s1 + $0x28] sm:$0xff]
        %v348 = vld [vmem:[%s1 + $0x30] sm:$0xff]
        %v349 = vld [vmem:[%s1 + $0x38] sm:$0xff]
        %v350 = vld [vmem:[%s1 + $0x40] sm:$0xff]
        %v351 = vld [vmem:[%s1 + $0x48] sm:$0xff]
        %v352 = vld [vmem:[%s1 + $0x50] sm:$0xff]
        %v353 = vld [vmem:[%s1 + $0x58] sm:$0xff]
        %v354 = vld [vmem:[%s1 + $0x60] sm:$0xff]
        %v355 = vld [vmem:[%s1 + $0x68] sm:$0xff]
        %v356 = vld [vmem:[%s1 + $0x70] sm:$0xff]
        %v357 = vld [vmem:[%s1 + $0x78] sm:$0xff]
        %v358 = vld [vmem:[%s1 + $0x80] sm:$0xff]
        %v359 = vld [vmem:[%s1 + $0x88] sm:$0xff]
        %v360 = vld [vmem:[%s1 + $0x90] sm:$0xff]
        %v361 = vld [vmem:[%s1 + $0x98] sm:$0xff]
        %v362 = vld [vmem:[%s1 + $0xa0] sm:$0xff]
        %v363 = vld [vmem:[%s1 + $0xa8] sm:$0xff]
        %v364 = vld [vmem:[%s1 + $0xb0] sm:$0xff]
        %v365 = vld [vmem:[%s1 + $0xb8] sm:$0xff]
        %v366 = vld [vmem:[%s1 + $0xc0] sm:$0xff]
        %v367 = vld [vmem:[%s1 + $0xc8] sm:$0xff]
        %v368 = vld [vmem:[%s1 + $0xd0] sm:$0xff]
        %v369 = vld [vmem:[%s1 + $0xd8] sm:$0xff]
        %v370 = vld [vmem:[%s1 + $0xe0] sm:$0xff]
        %v371 = vld [vmem:[%s1 + $0xe8] sm:$0xff]
        %v372 = vld [vmem:[%s1 + $0xf0] sm:$0xff]
        %v373 = vld [vmem:[%s1 + $0xf8] sm:$0xff]
        %v374 = vld [vmem:[%s1 + $0x100] sm:$0xff]
        %v375 = vld [vmem:[%s1 + $0x108] sm:$0xff]
        %v376 = vld [vmem:[%s1 + $0x110] sm:$0xff]
        %v377 = vld [vmem:[%s1 + $0x118] sm:$0xff]
        %v378 = vld [vmem:[%s1 + $0x120] sm:$0xff]
        %v379 = vld [vmem:[%s1 + $0x128] sm:$0xff]
        %v380 = vld [vmem:[%s1 + $0x130] sm:$0xff]
        %v381 = vld [vmem:[%s1 + $0x138] sm:$0xff]
        %v382 = vld [vmem:[%s1 + $0x140] sm:$0xff]
        %v383 = vld [vmem:[%s1 + $0x148] sm:$0xff]
        %v384 = vld [vmem:[%s1 + $0x150] sm:$0xff]
        %v385 = vld [vmem:[%s1 + $0x158] sm:$0xff]
        %v386 = vld [vmem:[%s1 + $0x160] sm:$0xff]
        %v387 = vld [vmem:[%s1 + $0x168] sm:$0xff]
        %v388 = vld [vmem:[%s1 + $0x170] sm:$0xff]
        %v389 = vld [vmem:[%s1 + $0x178] sm:$0xff]
        %v390 = vld [vmem:[%s2] sm:$0x1]
        %v392 = vperm.slane %v390, 0
        %394 = vmatpush.msra.mxu0 %v357
        %395 = vmatpush.msra.mxu0 %v356
        %396 = vmatpush.msra.mxu0 %v355
        %397 = vmatpush.msra.mxu0 %v354
        %398 = vmatpush.msra.mxu0 %v353
        %399 = vmatpush.msra.mxu0 %v352
        %400 = vmatpush.msra.mxu0 %v351
        %401 = vmatpush.msra.mxu0 %v350
        %402 = vmatpush.msra.mxu0 %v349
        %403 = vmatpush.msra.mxu0 %v348
        %404 = vmatpush.msra.mxu0 %v347
        %405 = vmatpush.msra.mxu0 %v346
        %406 = vmatpush.msra.mxu0 %v345
        %407 = vmatpush.msra.mxu0 %v344
        %408 = vmatpush.msra.mxu0 %v343
        %409 = vmatpush.msra.mxu0 %v342
        %410 = vmatmul.f32.gmra.mxu0 %v332
        %v411 = vpop.f32.mrf.mxu0
        %v412 = vadd.f32 %v392, %v411
        %413 = vdwg.mxu0
        %414 = vmatpush.msra.mxu0 %v373
        %415 = vmatpush.msra.mxu0 %v372
        %416 = vmatpush.msra.mxu0 %v371
        %417 = vmatpush.msra.mxu0 %v370
        %418 = vmatpush.msra.mxu0 %v369
        %419 = vmatpush.msra.mxu0 %v368
        %420 = vmatpush.msra.mxu0 %v367
        %421 = vmatpush.msra.mxu0 %v366
        %422 = vmatpush.msra.mxu0 %v365
        %423 = vmatpush.msra.mxu0 %v364
        %424 = vmatpush.msra.mxu0 %v363
        %425 = vmatpush.msra.mxu0 %v362
        %426 = vmatpush.msra.mxu0 %v361
        %427 = vmatpush.msra.mxu0 %v360
        %428 = vmatpush.msra.mxu0 %v359
        %429 = vmatpush.msra.mxu0 %v358
        %430 = vmatmul.f32.gmra.mxu0 %v336
        %v431 = vpop.f32.mrf.mxu0
        %v432 = vadd.f32 %v412, %v431
        %433 = vdwg.mxu0
        %434 = vmatpush.msra.mxu0 %v389
        %435 = vmatpush.msra.mxu0 %v388
        %436 = vmatpush.msra.mxu0 %v387
        %437 = vmatpush.msra.mxu0 %v386
        %438 = vmatpush.msra.mxu0 %v385
        %439 = vmatpush.msra.mxu0 %v384
        %440 = vmatpush.msra.mxu0 %v383
        %441 = vmatpush.msra.mxu0 %v382
        %442 = vmatpush.msra.mxu0 %v381
        %443 = vmatpush.msra.mxu0 %v380
        %444 = vmatpush.msra.mxu0 %v379
        %445 = vmatpush.msra.mxu0 %v378
        %446 = vmatpush.msra.mxu0 %v377
        %447 = vmatpush.msra.mxu0 %v376
        %448 = vmatpush.msra.mxu0 %v375
        %449 = vmatpush.msra.mxu0 %v374
        %450 = vmatmul.f32.gmra.mxu0 %v341
        %v451 = vpop.f32.mrf.mxu0
        %v452 = vadd.f32 %v432, %v451
        %453 = vdwg.mxu0
        %vm454 = vcmask 523264
        %v455 = vsel %vm454, %v452, 0.0
        %456 = vadd.xlane.f32.xlu0 %v455
        %v457 = vpop.xlane.xlu0 %456
        %v458 = vrcp.pop 64.0
        %v459 = vmul.f32 64.0, %v458
        %v460 = vsub.f32 1.0, %v459
        %v461 = vmul.f32 %v458, %v460
        %v462 = vadd.f32 %v458, %v461
        %vm463 = vweird.f32 %v458
        %v464 = vsel %vm463, %v458, %v462
        %v465 = vmul.f32 %v457, %v464
        %v466 = vsub.f32 %v452, %v465
        %v467 = vmul.f32 %v466, %v466
        %v468 = vsel %vm454, %v467, 0.0
        %469 = vadd.xlane.f32.xlu0 %v468
        %v470 = vpop.xlane.xlu0 %469
        %v471 = vmul.f32 %v470, %v464
        %v472 = vadd.f32 %v471, 1e-05
        %v473 = vrsqrt.pop %v472
        %v474 = vmul.f32 %v473, %v472
        %v475 = vmul.f32 %v474, %v473
        %v476 = vmul.f32 0.5, %v475
        %v477 = vsub.f32 1.5, %v476
        %v478 = vmul.f32 %v473, %v477
        %vm479 = vweird.f32 %v472
        %vm480 = vweird.f32 %v473
        %vm481 = vmor %vm479, %vm480
        %v482 = vsel %vm481, %v473, %v478
        %v483 = vmul.f32 %v466, %v482
        %v484 = vld [vmem:[%s3] sm:$0x1]
        %v486 = vperm.slane %v484, 0
        %v488 = vmul.f32 %v483, %v486
        %v489 = vld [vmem:[%s4] sm:$0x1]
        %v491 = vperm.slane %v489, 0
        %v493 = vadd.f32 %v488, %v491
        %v494 = vtanh.pop %v493
        %v495 = vsel %vm454, %v494, 0.0
        %v496 = vmul.f32 %v495, 4.0
        %v497 = vadd.f32 %v496, 0.0
        %v498 = vmul.f32 %v497, 0.5
        %v499 = vmul.f32 %v495, 1.875
        %v500 = vadd.f32 %v499, 0.0
        %v501 = vmul.f32 %v500, %v498
        %v502 = vsub.f32 %v501, 0.75
        %v503 = vmul.f32 %v495, 1.8666667
        %v504 = vadd.f32 %v503, 0.0
        %v505 = vmul.f32 %v504, %v502
        %v506 = vmul.f32 %v498, 0.8
        %v507 = vsub.f32 %v505, %v506
        %v508 = vld [vmem:[%s5] sm:$0xff]
        %v509 = vld [vmem:[%s5 + $0x8] sm:$0xff]
        %v510 = vld [vmem:[%s5 + $0x10] sm:$0xff]
        %v511 = vld [vmem:[%s5 + $0x18] sm:$0xff]
        %v512 = vld [vmem:[%s5 + $0x20] sm:$0xff]
        %v513 = vld [vmem:[%s5 + $0x28] sm:$0xff]
        %v514 = vld [vmem:[%s5 + $0x30] sm:$0xff]
        %v515 = vld [vmem:[%s5 + $0x38] sm:$0xff]
        %v516 = vld [vmem:[%s5 + $0x40] sm:$0xff]
        %v517 = vld [vmem:[%s5 + $0x48] sm:$0xff]
        %v518 = vld [vmem:[%s5 + $0x50] sm:$0xff]
        %v519 = vld [vmem:[%s5 + $0x58] sm:$0xff]
        %v520 = vld [vmem:[%s5 + $0x60] sm:$0xff]
        %v521 = vld [vmem:[%s5 + $0x68] sm:$0xff]
        %v522 = vld [vmem:[%s5 + $0x70] sm:$0xff]
        %v523 = vld [vmem:[%s5 + $0x78] sm:$0xff]
        %v524 = vld [vmem:[%s5 + $0x80] sm:$0xff]
        %v525 = vld [vmem:[%s5 + $0x88] sm:$0xff]
        %v526 = vld [vmem:[%s5 + $0x90] sm:$0xff]
        %v527 = vld [vmem:[%s5 + $0x98] sm:$0xff]
        %v528 = vld [vmem:[%s5 + $0xa0] sm:$0xff]
        %v529 = vld [vmem:[%s5 + $0xa8] sm:$0xff]
        %v530 = vld [vmem:[%s5 + $0xb0] sm:$0xff]
        %v531 = vld [vmem:[%s5 + $0xb8] sm:$0xff]
        %v532 = vld [vmem:[%s5 + $0xc0] sm:$0xff]
        %v533 = vld [vmem:[%s5 + $0xc8] sm:$0xff]
        %v534 = vld [vmem:[%s5 + $0xd0] sm:$0xff]
        %v535 = vld [vmem:[%s5 + $0xd8] sm:$0xff]
        %v536 = vld [vmem:[%s5 + $0xe0] sm:$0xff]
        %v537 = vld [vmem:[%s5 + $0xe8] sm:$0xff]
        %v538 = vld [vmem:[%s5 + $0xf0] sm:$0xff]
        %v539 = vld [vmem:[%s5 + $0xf8] sm:$0xff]
        %v540 = vld [vmem:[%s5 + $0x100] sm:$0xff]
        %v541 = vld [vmem:[%s5 + $0x108] sm:$0xff]
        %v542 = vld [vmem:[%s5 + $0x110] sm:$0xff]
        %v543 = vld [vmem:[%s5 + $0x118] sm:$0xff]
        %v544 = vld [vmem:[%s5 + $0x120] sm:$0xff]
        %v545 = vld [vmem:[%s5 + $0x128] sm:$0xff]
        %v546 = vld [vmem:[%s5 + $0x130] sm:$0xff]
        %v547 = vld [vmem:[%s5 + $0x138] sm:$0xff]
        %v548 = vld [vmem:[%s5 + $0x140] sm:$0xff]
        %v549 = vld [vmem:[%s5 + $0x148] sm:$0xff]
        %v550 = vld [vmem:[%s5 + $0x150] sm:$0xff]
        %v551 = vld [vmem:[%s5 + $0x158] sm:$0xff]
        %v552 = vld [vmem:[%s5 + $0x160] sm:$0xff]
        %v553 = vld [vmem:[%s5 + $0x168] sm:$0xff]
        %v554 = vld [vmem:[%s5 + $0x170] sm:$0xff]
        %v555 = vld [vmem:[%s5 + $0x178] sm:$0xff]
        %v556 = vld [vmem:[%s6] sm:$0x1]
        %v558 = vperm.slane %v556, 0
        %560 = vmatpush.msra.mxu0 %v523
        %561 = vmatpush.msra.mxu0 %v522
        %562 = vmatpush.msra.mxu0 %v521
        %563 = vmatpush.msra.mxu0 %v520
        %564 = vmatpush.msra.mxu0 %v519
        %565 = vmatpush.msra.mxu0 %v518
        %566 = vmatpush.msra.mxu0 %v517
        %567 = vmatpush.msra.mxu0 %v516
        %568 = vmatpush.msra.mxu0 %v515
        %569 = vmatpush.msra.mxu0 %v514
        %570 = vmatpush.msra.mxu0 %v513
        %571 = vmatpush.msra.mxu0 %v512
        %572 = vmatpush.msra.mxu0 %v511
        %573 = vmatpush.msra.mxu0 %v510
        %574 = vmatpush.msra.mxu0 %v509
        %575 = vmatpush.msra.mxu0 %v508
        %576 = vmatmul.f32.gmra.mxu0 %v498
        %v577 = vpop.f32.mrf.mxu0
        %v578 = vadd.f32 %v558, %v577
        %579 = vdwg.mxu0
        %580 = vmatpush.msra.mxu0 %v539
        %581 = vmatpush.msra.mxu0 %v538
        %582 = vmatpush.msra.mxu0 %v537
        %583 = vmatpush.msra.mxu0 %v536
        %584 = vmatpush.msra.mxu0 %v535
        %585 = vmatpush.msra.mxu0 %v534
        %586 = vmatpush.msra.mxu0 %v533
        %587 = vmatpush.msra.mxu0 %v532
        %588 = vmatpush.msra.mxu0 %v531
        %589 = vmatpush.msra.mxu0 %v530
        %590 = vmatpush.msra.mxu0 %v529
        %591 = vmatpush.msra.mxu0 %v528
        %592 = vmatpush.msra.mxu0 %v527
        %593 = vmatpush.msra.mxu0 %v526
        %594 = vmatpush.msra.mxu0 %v525
        %595 = vmatpush.msra.mxu0 %v524
        %596 = vmatmul.f32.gmra.mxu0 %v502
        %v597 = vpop.f32.mrf.mxu0
        %v598 = vadd.f32 %v578, %v597
        %599 = vdwg.mxu0
        %600 = vmatpush.msra.mxu0 %v555
        %601 = vmatpush.msra.mxu0 %v554
        %602 = vmatpush.msra.mxu0 %v553
        %603 = vmatpush.msra.mxu0 %v552
        %604 = vmatpush.msra.mxu0 %v551
        %605 = vmatpush.msra.mxu0 %v550
        %606 = vmatpush.msra.mxu0 %v549
        %607 = vmatpush.msra.mxu0 %v548
        %608 = vmatpush.msra.mxu0 %v547
        %609 = vmatpush.msra.mxu0 %v546
        %610 = vmatpush.msra.mxu0 %v545
        %611 = vmatpush.msra.mxu0 %v544
        %612 = vmatpush.msra.mxu0 %v543
        %613 = vmatpush.msra.mxu0 %v542
        %614 = vmatpush.msra.mxu0 %v541
        %615 = vmatpush.msra.mxu0 %v540
        %616 = vmatmul.f32.gmra.mxu0 %v507
        %v617 = vpop.f32.mrf.mxu0
        %v618 = vadd.f32 %v598, %v617
        %619 = vdwg.mxu0
        %vm620 = vcmask 261120
        %v621 = vsel %vm620, %v618, 0.0
        %622 = vadd.xlane.f32.xlu0 %v621
        %v623 = vpop.xlane.xlu0 %622
        %v624 = vrcp.pop 32.0
        %v625 = vmul.f32 32.0, %v624
        %v626 = vsub.f32 1.0, %v625
        %v627 = vmul.f32 %v624, %v626
        %v628 = vadd.f32 %v624, %v627
        %vm629 = vweird.f32 %v624
        %v630 = vsel %vm629, %v624, %v628
        %v631 = vmul.f32 %v623, %v630
        %v632 = vsub.f32 %v618, %v631
        %v633 = vmul.f32 %v632, %v632
        %v634 = vsel %vm620, %v633, 0.0
        %635 = vadd.xlane.f32.xlu0 %v634
        %v636 = vpop.xlane.xlu0 %635
        %v637 = vmul.f32 %v636, %v630
        %v638 = vadd.f32 %v637, 1e-05
        %v639 = vrsqrt.pop %v638
        %v640 = vmul.f32 %v639, %v638
        %v641 = vmul.f32 %v640, %v639
        %v642 = vmul.f32 0.5, %v641
        %v643 = vsub.f32 1.5, %v642
        %v644 = vmul.f32 %v639, %v643
        %vm645 = vweird.f32 %v638
        %vm646 = vweird.f32 %v639
        %vm647 = vmor %vm645, %vm646
        %v648 = vsel %vm647, %v639, %v644
        %v649 = vmul.f32 %v632, %v648
        %v650 = vld [vmem:[%s7] sm:$0x1]
        %v652 = vperm.slane %v650, 0
        %v654 = vmul.f32 %v649, %v652
        %v655 = vld [vmem:[%s8] sm:$0x1]
        %v657 = vperm.slane %v655, 0
        %v659 = vadd.f32 %v654, %v657
        %v660 = vsel %vm620, %v659, 0.0
        %661 = vst [vmem:[%s323] sm:$0xff] %v660
        %s662 = sand.u32 %s225, 1
        %s663 = scalar_lea.sflag [#allocation3], %s662
        %s664 = sand.u32 %s225, 1
        %s665 = smul.addr %s664, 8
        %s666 = scalar_lea.vmem [#allocation2], %s665
        // Predicated region
        $region57: #{tpu_custom_call.1} parent=55 // pred_check
          %p667 = pneg %p235
        $region58: #{tpu_custom_call.1} parent=55 // pred_check_branch
          %669 = sbr.rel (%p667) target = $region60
        $region59: #{tpu_custom_call.1} parent=55 // pred_region
          %671 = vsyncadd %s663, 0
          %s672 = smul.addr %s23, 8
          %s673 = scalar_lea.hbm %s9, %s672
          %s675 = sshll.u32 %s666, 4
          %s676 = int_to_ptr.vmem [resolvable:$true] %s675
          %s677 = sshll.u32 %s673, 4
          %s678 = int_to_ptr.hbm [resolvable:$true] %s677
          %680 = dma.vmem_to_hbm [thread:$0]  %s676, 128, %s678, %s663
        $region60: #{tpu_custom_call.1} parent=55 // pred_fallthru
          _
      $region56: #{tpu_custom_call.1} parent=5 // pred_fallthru
        _
      %p681 = scmp.le.s32.totalorder 2, %s18
      // Predicated region
      $region61: #{tpu_custom_call.1} parent=5 // pred_check
        %p682 = pneg %p681
      $region62: #{tpu_custom_call.1} parent=5 // pred_check_branch
        %684 = sbr.rel (%p682) target = $region64
      $region63: #{tpu_custom_call.1} parent=5 // pred_region
        %s685 = ssub.s32 %s18, 2
        // Predicated region
        $region65: #{tpu_custom_call.1} parent=63 // pred_check
          %p686 = pneg %p241
        $region66: #{tpu_custom_call.1} parent=63 // pred_check_branch
          %688 = sbr.rel (%p686) target = $region68
        $region67: #{tpu_custom_call.1} parent=63 // pred_region
          %s689 = sand.u32 %s226, 1
          %s690 = scalar_lea.sflag [#allocation3], %s689
          %s691 = sand.u32 %s226, 1
          %s692 = smul.addr %s691, 8
          %s693 = scalar_lea.vmem [#allocation2], %s692
          %695 = dma.done %s690, 128
        $region68: #{tpu_custom_call.1} parent=63 // pred_fallthru
          _
      $region64: #{tpu_custom_call.1} parent=5 // pred_fallthru
        _
    $region6: #{tpu_custom_call.1} parent=1 // loop_footer
      %s22 = sadd.s32 1, %s18
    $region7: #{tpu_custom_call.1} parent=1 // loop_footer_branch
      %17 = sbr.rel target = $region3
    $region8: #{tpu_custom_call.1} parent=1 // loop_exit
      _
    %696 = vsyncpa [#allocation3], 1
    %s697 = scalar_lea.sflag [#allocation3], 1
    %698 = vsyncpa %s697, 1

// kernel: tpu_custom_call.1
$region0: #{tpu_custom_call.1}
  #allocation0 [shape = 'u32[]', space=smem, size = 0x4, offset = 0x4, fixed_abs, tag = 'smem constant byte address 0x4 - core index']
  #allocation1 [shape = 'u32[72,128]{1,0:T(1,128)}', space=vmem, size = 0x9000, scoped, tag = 'internal scratch']
  %s0 = inlined_call_operand.vmem [shape: f32[16,128], index: 0, kind: input, shape index: {}]
  %s1 = inlined_call_operand.vmem [shape: f32[384,64], index: 1, kind: input, shape index: {}]
  %s2 = inlined_call_operand.vmem [shape: f32[1,64], index: 2, kind: input, shape index: {}]
  %s3 = inlined_call_operand.vmem [shape: f32[1,64], index: 3, kind: input, shape index: {}]
  %s4 = inlined_call_operand.vmem [shape: f32[1,64], index: 4, kind: input, shape index: {}]
  %s5 = inlined_call_operand.vmem [shape: f32[384,32], index: 5, kind: input, shape index: {}]
  %s6 = inlined_call_operand.vmem [shape: f32[1,32], index: 6, kind: input, shape index: {}]
  %s7 = inlined_call_operand.vmem [shape: f32[1,32], index: 7, kind: input, shape index: {}]
  %s8 = inlined_call_operand.vmem [shape: f32[1,32], index: 8, kind: input, shape index: {}]
  %s9 = inlined_call_operand.hbm [shape: f32[16,128], index: 9, kind: output, shape index: {}]
  %s10 = sld [smem:[#allocation0]]
  $region69: #{tpu_custom_call.1} parent=0
    _
  %s12 = ssub.s32 1, %s10
  %s13 = scalar_select 0, %s12, %s10
  $region1: #{tpu_custom_call.1} parent=0
    #allocation2 [shape = 'u8[8192]{0}', space=vmem, size = 0x2000, scoped, tag = 'output window, operand 0']
    #allocation3 [shape = 's32[2]{0}', space=sflag, size = 0x8, scoped, tag = 'scoped memory for tpu_custom_call.1']
    %14 = vsyncpa [#allocation3], 0
    %s15 = scalar_lea.sflag [#allocation3], 1
    %16 = vsyncpa %s15, 0
    loop: start=0, step=1, limit=4
    $region2: #{tpu_custom_call.1} parent=1 // loop_pre_header
      _
    $region3: #{tpu_custom_call.1} parent=1 // loop_header
      %s18 = sphi 0, %s22
      %p19 = scmp.ge.s32.totalorder %s18, 4
      %s28 = sphi 0, %s30
      %s31 = sphi 0, %s28
      %s32 = sphi 0, %s31
      %s48 = sphi 0, %s32
      %s52 = sphi 0, %s52
      %s54 = sphi 0, %s52
      %s55 = sphi 0, %s54
      %s69 = sphi 0, %s55
      %s73 = sphi 0, %s73
      %s75 = sphi 0, %s73
      %s76 = sphi 0, %s75
      %s90 = sphi 0, %s76
      %s94 = sphi 0, %s94
      %s96 = sphi 0, %s94
      %s97 = sphi 0, %s96
      %s111 = sphi 0, %s97
      %s115 = sphi 0, %s115
      %s117 = sphi 0, %s115
      %s118 = sphi 0, %s117
      %s132 = sphi 0, %s118
      %s136 = sphi 0, %s136
      %s138 = sphi 0, %s136
      %s139 = sphi 0, %s138
      %s153 = sphi 0, %s139
      %s157 = sphi 0, %s157
      %s159 = sphi 0, %s157
      %s160 = sphi 0, %s159
      %s174 = sphi 0, %s160
      %s178 = sphi 0, %s178
      %s180 = sphi 0, %s178
      %s181 = sphi 0, %s180
      %s195 = sphi 0, %s181
      %s199 = sphi 0, %s199
      %s201 = sphi 0, %s199
      %s202 = sphi 0, %s201
      %s216 = sphi 0, %s202
      %s222 = sphi 0, %s224
      %s225 = sphi 0, %s222
      %s226 = sphi 0, %s225
      %s242 = sphi 0, %s226
    $region4: #{tpu_custom_call.1} parent=1 // loop_header_branch
      %21 = sbr.rel (%p19) target = $region8
    $region5: #{tpu_custom_call.1} parent=1 // loop_body
      %s23 = ssub.s32 %s18, 1
      %s24 = ssub.s32 %s18, 2
      %s25 = sadd.s32 %s18, 1
      %s26 = ssub.s32 %s18, %s25
      %p27 = scmp.eq.s32.totalorder %s26, 0
      %s29 = sadd.s32 %s28, 1
      %s30 = scalar_select %p27, %s28, %s29
      %p33 = pneg %p27
      %p34 = scmp.eq.s32.totalorder %s18, 1
      %p35 = por %p33, %p34
      %p36 = scmp.ne.s32.totalorder %s28, %s31
      %p37 = scmp.eq.s32.totalorder %s18, 0
      %p38 = por %p36, %p37
      %p39 = scmp.ne.s32.totalorder %s28, %s31
      %p40 = scmp.eq.s32.totalorder %s23, 1
      %p41 = por %p39, %p40
      %p42 = scmp.ne.s32.totalorder %s31, %s32
      %p43 = scmp.eq.s32.totalorder %s23, 0
      %p44 = por %p42, %p43
      %p45 = scmp.ne.s32.totalorder %s31, %s32
      %p46 = scmp.eq.s32.totalorder %s24, 1
      %p47 = por %p45, %p46
      %p49 = scmp.ne.s32.totalorder %s32, %s48
      %p50 = scmp.eq.s32.totalorder %s24, 0
      %p51 = por %p49, %p50
      %s53 = sadd.s32 %s52, 1
      %p56 = scmp.eq.s32.totalorder %s18, 1
      %p57 = scmp.ne.s32.totalorder %s52, %s54
      %p58 = scmp.eq.s32.totalorder %s18, 0
      %p59 = por %p57, %p58
      %p60 = scmp.ne.s32.totalorder %s52, %s54
      %p61 = scmp.eq.s32.totalorder %s23, 1
      %p62 = por %p60, %p61
      %p63 = scmp.ne.s32.totalorder %s54, %s55
      %p64 = scmp.eq.s32.totalorder %s23, 0
      %p65 = por %p63, %p64
      %p66 = scmp.ne.s32.totalorder %s54, %s55
      %p67 = scmp.eq.s32.totalorder %s24, 1
      %p68 = por %p66, %p67
      %p70 = scmp.ne.s32.totalorder %s55, %s69
      %p71 = scmp.eq.s32.totalorder %s24, 0
      %p72 = por %p70, %p71
      %s74 = sadd.s32 %s73, 1
      %p77 = scmp.eq.s32.totalorder %s18, 1
      %p78 = scmp.ne.s32.totalorder %s73, %s75
      %p79 = scmp.eq.s32.totalorder %s18, 0
      %p80 = por %p78, %p79
      %p81 = scmp.ne.s32.totalorder %s73, %s75
      %p82 = scmp.eq.s32.totalorder %s23, 1
      %p83 = por %p81, %p82
      %p84 = scmp.ne.s32.totalorder %s75, %s76
      %p85 = scmp.eq.s32.totalorder %s23, 0
      %p86 = por %p84, %p85
      %p87 = scmp.ne.s32.totalorder %s75, %s76
      %p88 = scmp.eq.s32.totalorder %s24, 1
      %p89 = por %p87, %p88
      %p91 = scmp.ne.s32.totalorder %s76, %s90
      %p92 = scmp.eq.s32.totalorder %s24, 0
      %p93 = por %p91, %p92
      %s95 = sadd.s32 %s94, 1
      %p98 = scmp.eq.s32.totalorder %s18, 1
      %p99 = scmp.ne.s32.totalorder %s94, %s96
      %p100 = scmp.eq.s32.totalorder %s18, 0
      %p101 = por %p99, %p100
      %p102 = scmp.ne.s32.totalorder %s94, %s96
      %p103 = scmp.eq.s32.totalorder %s23, 1
      %p104 = por %p102, %p103
      %p105 = scmp.ne.s32.totalorder %s96, %s97
      %p106 = scmp.eq.s32.totalorder %s23, 0
      %p107 = por %p105, %p106
      %p108 = scmp.ne.s32.totalorder %s96, %s97
      %p109 = scmp.eq.s32.totalorder %s24, 1
      %p110 = por %p108, %p109
      %p112 = scmp.ne.s32.totalorder %s97, %s111
      %p113 = scmp.eq.s32.totalorder %s24, 0
      %p114 = por %p112, %p113
      %s116 = sadd.s32 %s115, 1
      %p119 = scmp.eq.s32.totalorder %s18, 1
      %p120 = scmp.ne.s32.totalorder %s115, %s117
      %p121 = scmp.eq.s32.totalorder %s18, 0
      %p122 = por %p120, %p121
      %p123 = scmp.ne.s32.totalorder %s115, %s117
      %p124 = scmp.eq.s32.totalorder %s23, 1
      %p125 = por %p123, %p124
      %p126 = scmp.ne.s32.totalorder %s117, %s118
      %p127 = scmp.eq.s32.totalorder %s23, 0
      %p128 = por %p126, %p127
      %p129 = scmp.ne.s32.totalorder %s117, %s118
      %p130 = scmp.eq.s32.totalorder %s24, 1
      %p131 = por %p129, %p130
      %p133 = scmp.ne.s32.totalorder %s118, %s132
      %p134 = scmp.eq.s32.totalorder %s24, 0
      %p135 = por %p133, %p134
      %s137 = sadd.s32 %s136, 1
      %p140 = scmp.eq.s32.totalorder %s18, 1
      %p141 = scmp.ne.s32.totalorder %s136, %s138
      %p142 = scmp.eq.s32.totalorder %s18, 0
      %p143 = por %p141, %p142
      %p144 = scmp.ne.s32.totalorder %s136, %s138
      %p145 = scmp.eq.s32.totalorder %s23, 1
      %p146 = por %p144, %p145
      %p147 = scmp.ne.s32.totalorder %s138, %s139
      %p148 = scmp.eq.s32.totalorder %s23, 0
      %p149 = por %p147, %p148
      %p150 = scmp.ne.s32.totalorder %s138, %s139
      %p151 = scmp.eq.s32.totalorder %s24, 1
      %p152 = por %p150, %p151
      %p154 = scmp.ne.s32.totalorder %s139, %s153
      %p155 = scmp.eq.s32.totalorder %s24, 0
      %p156 = por %p154, %p155
      %s158 = sadd.s32 %s157, 1
      %p161 = scmp.eq.s32.totalorder %s18, 1
      %p162 = scmp.ne.s32.totalorder %s157, %s159
      %p163 = scmp.eq.s32.totalorder %s18, 0
      %p164 = por %p162, %p163
      %p165 = scmp.ne.s32.totalorder %s157, %s159
      %p166 = scmp.eq.s32.totalorder %s23, 1
      %p167 = por %p165, %p166
      %p168 = scmp.ne.s32.totalorder %s159, %s160
      %p169 = scmp.eq.s32.totalorder %s23, 0
      %p170 = por %p168, %p169
      %p171 = scmp.ne.s32.totalorder %s159, %s160
      %p172 = scmp.eq.s32.totalorder %s24, 1
      %p173 = por %p171, %p172
      %p175 = scmp.ne.s32.totalorder %s160, %s174
      %p176 = scmp.eq.s32.totalorder %s24, 0
      %p177 = por %p175, %p176
      %s179 = sadd.s32 %s178, 1
      %p182 = scmp.eq.s32.totalorder %s18, 1
      %p183 = scmp.ne.s32.totalorder %s178, %s180
      %p184 = scmp.eq.s32.totalorder %s18, 0
      %p185 = por %p183, %p184
      %p186 = scmp.ne.s32.totalorder %s178, %s180
      %p187 = scmp.eq.s32.totalorder %s23, 1
      %p188 = por %p186, %p187
      %p189 = scmp.ne.s32.totalorder %s180, %s181
      %p190 = scmp.eq.s32.totalorder %s23, 0
      %p191 = por %p189, %p190
      %p192 = scmp.ne.s32.totalorder %s180, %s181
      %p193 = scmp.eq.s32.totalorder %s24, 1
      %p194 = por %p192, %p193
      %p196 = scmp.ne.s32.totalorder %s181, %s195
      %p197 = scmp.eq.s32.totalorder %s24, 0
      %p198 = por %p196, %p197
      %s200 = sadd.s32 %s199, 1
      %p203 = scmp.eq.s32.totalorder %s18, 1
      %p204 = scmp.ne.s32.totalorder %s199, %s201
      %p205 = scmp.eq.s32.totalorder %s18, 0
      %p206 = por %p204, %p205
      %p207 = scmp.ne.s32.totalorder %s199, %s201
      %p208 = scmp.eq.s32.totalorder %s23, 1
      %p209 = por %p207, %p208
      %p210 = scmp.ne.s32.totalorder %s201, %s202
      %p211 = scmp.eq.s32.totalorder %s23, 0
      %p212 = por %p210, %p211
      %p213 = scmp.ne.s32.totalorder %s201, %s202
      %p214 = scmp.eq.s32.totalorder %s24, 1
      %p215 = por %p213, %p214
      %p217 = scmp.ne.s32.totalorder %s202, %s216
      %p218 = scmp.eq.s32.totalorder %s24, 0
      %p219 = por %p217, %p218
      %s220 = ssub.s32 %s18, %s25
      %p221 = scmp.eq.s32.totalorder %s220, 0
      %s223 = sadd.s32 %s222, 1
      %s224 = scalar_select %p221, %s222, %s223
      %p227 = pneg %p221
      %p228 = scmp.eq.s32.totalorder %s18, 1
      %p229 = por %p227, %p228
      %p230 = scmp.ne.s32.totalorder %s222, %s225
      %p231 = scmp.eq.s32.totalorder %s18, 0
      %p232 = por %p230, %p231
      %p233 = scmp.ne.s32.totalorder %s222, %s225
      %p234 = scmp.eq.s32.totalorder %s23, 1
      %p235 = por %p233, %p234
      %p236 = scmp.ne.s32.totalorder %s225, %s226
      %p237 = scmp.eq.s32.totalorder %s23, 0
      %p238 = por %p236, %p237
      %p239 = scmp.ne.s32.totalorder %s225, %s226
      %p240 = scmp.eq.s32.totalorder %s24, 1
      %p241 = por %p239, %p240
      %p243 = scmp.ne.s32.totalorder %s226, %s242
      %p244 = scmp.eq.s32.totalorder %s24, 0
      %p245 = por %p243, %p244
      %p246 = scmp.le.s32.totalorder 1, %s18
      %p247 = scmp.lt.s32.totalorder %s18, 3
      %p248 = pnand %p246, %p247
      %p249 = pneg %p248
      // Predicated region
      $region9: #{tpu_custom_call.1} parent=5 // pred_check
        _
      $region10: #{tpu_custom_call.1} parent=5 // pred_check_branch
        %251 = sbr.rel (%p248) target = $region12
      $region11: #{tpu_custom_call.1} parent=5 // pred_region
        %s252 = ssub.s32 %s18, 1
        // Predicated region
        $region13: #{tpu_custom_call.1} parent=11 // pred_check
          %p253 = pneg %p65
        $region14: #{tpu_custom_call.1} parent=11 // pred_check_branch
          %255 = sbr.rel (%p253) target = $region16
        $region15: #{tpu_custom_call.1} parent=11 // pred_region
          _
        $region16: #{tpu_custom_call.1} parent=11 // pred_fallthru
          _
        // Predicated region
        $region17: #{tpu_custom_call.1} parent=11 // pred_check
          %p256 = pneg %p86
        $region18: #{tpu_custom_call.1} parent=11 // pred_check_branch
          %258 = sbr.rel (%p256) target = $region20
        $region19: #{tpu_custom_call.1} parent=11 // pred_region
          _
        $region20: #{tpu_custom_call.1} parent=11 // pred_fallthru
          _
        // Predicated region
        $region21: #{tpu_custom_call.1} parent=11 // pred_check
          %p259 = pneg %p107
        $region22: #{tpu_custom_call.1} parent=11 // pred_check_branch
          %261 = sbr.rel (%p259) target = $region24
        $region23: #{tpu_custom_call.1} parent=11 // pred_region
          _
        $region24: #{tpu_custom_call.1} parent=11 // pred_fallthru
          _
        // Predicated region
        $region25: #{tpu_custom_call.1} parent=11 // pred_check
          %p262 = pneg %p128
        $region26: #{tpu_custom_call.1} parent=11 // pred_check_branch
          %264 = sbr.rel (%p262) target = $region28
        $region27: #{tpu_custom_call.1} parent=11 // pred_region
          _
        $region28: #{tpu_custom_call.1} parent=11 // pred_fallthru
          _
        // Predicated region
        $region29: #{tpu_custom_call.1} parent=11 // pred_check
          %p265 = pneg %p149
        $region30: #{tpu_custom_call.1} parent=11 // pred_check_branch
          %267 = sbr.rel (%p265) target = $region32
        $region31: #{tpu_custom_call.1} parent=11 // pred_region
          _
        $region32: #{tpu_custom_call.1} parent=11 // pred_fallthru
          _
        // Predicated region
        $region33: #{tpu_custom_call.1} parent=11 // pred_check
          %p268 = pneg %p170
        $region34: #{tpu_custom_call.1} parent=11 // pred_check_branch
          %270 = sbr.rel (%p268) target = $region36
        $region35: #{tpu_custom_call.1} parent=11 // pred_region
          _
        $region36: #{tpu_custom_call.1} parent=11 // pred_fallthru
          _
        // Predicated region
        $region37: #{tpu_custom_call.1} parent=11 // pred_check
          %p271 = pneg %p191
        $region38: #{tpu_custom_call.1} parent=11 // pred_check_branch
          %273 = sbr.rel (%p271) target = $region40
        $region39: #{tpu_custom_call.1} parent=11 // pred_region
          _
        $region40: #{tpu_custom_call.1} parent=11 // pred_fallthru
          _
        // Predicated region
        $region41: #{tpu_custom_call.1} parent=11 // pred_check
          %p274 = pneg %p212
        $region42: #{tpu_custom_call.1} parent=11 // pred_check_branch
          %276 = sbr.rel (%p274) target = $region44
        $region43: #{tpu_custom_call.1} parent=11 // pred_region
          _
        $region44: #{tpu_custom_call.1} parent=11 // pred_fallthru
          _
      $region12: #{tpu_custom_call.1} parent=5 // pred_fallthru
        _
      %p277 = scmp.lt.s32.totalorder %s18, 2
      // Predicated region
      $region45: #{tpu_custom_call.1} parent=5 // pred_check
        %p278 = pneg %p277
      $region46: #{tpu_custom_call.1} parent=5 // pred_check_branch
        %280 = sbr.rel (%p278) target = $region48
      $region47: #{tpu_custom_call.1} parent=5 // pred_region
        // Predicated region
        $region49: #{tpu_custom_call.1} parent=47 // pred_check
          %p281 = pneg %p38
        $region50: #{tpu_custom_call.1} parent=47 // pred_check_branch
          %283 = sbr.rel (%p281) target = $region52
        $region51: #{tpu_custom_call.1} parent=47 // pred_region
          %p284 = scmp.lt.s32.totalorder %s18, 1
          %s285 = scalar_select %p284, %s18, 1
          %s286 = smul.addr %s285, 8
          %s287 = scalar_lea.vmem %s0, %s286
        $region52: #{tpu_custom_call.1} parent=47 // pred_fallthru
          _
      $region48: #{tpu_custom_call.1} parent=5 // pred_fallthru
        _
      %p288 = scmp.le.s32.totalorder 1, %s18
      %p289 = scmp.lt.s32.totalorder %s18, 3
      %p290 = pnand %p288, %p289
      %p291 = pneg %p290
      // Predicated region
      $region53: #{tpu_custom_call.1} parent=5 // pred_check
        _
      $region54: #{tpu_custom_call.1} parent=5 // pred_check_branch
        %293 = sbr.rel (%p290) target = $region56
      $region55: #{tpu_custom_call.1} parent=5 // pred_region
        %s294 = ssub.s32 %s18, 1
        %p295 = scmp.lt.s32.totalorder %s23, 1
        %s296 = scalar_select %p295, %s23, 1
        %s297 = smul.addr %s296, 8
        %s298 = scalar_lea.vmem %s0, %s297
        %p299 = pneg %p44
        %p300 = pneg %p41
        %p301 = pneg %p65
        %p302 = pneg %p62
        %p303 = pneg %p86
        %p304 = pneg %p83
        %p305 = pneg %p107
        %p306 = pneg %p104
        %p307 = pneg %p128
        %p308 = pneg %p125
        %p309 = pneg %p149
        %p310 = pneg %p146
        %p311 = pneg %p170
        %p312 = pneg %p167
        %p313 = pneg %p191
        %p314 = pneg %p188
        %p315 = pneg %p212
        %p316 = pneg %p209
        %p317 = pneg %p238
        %p318 = pneg %p235
        %s319 = sand.u32 %s225, 1
        %s320 = scalar_lea.sflag [#allocation3], %s319
        %s321 = sand.u32 %s225, 1
        %s322 = smul.addr %s321, 8
        %s323 = scalar_lea.vmem [#allocation2], %s322
        %p324 = scmp.lt.s32.totalorder %s23, 1
        %s325 = scalar_select %p324, %s23, 1
        %s326 = smul.addr %s325, 8
        %s327 = scalar_lea.vmem %s0, %s326
        %v328 = vld [vmem:[%s327] sm:$0xff]
        %v329 = vtanh.pop %v328
        %v330 = vmul.f32 %v329, 4.0
        %v331 = vadd.f32 %v330, 0.0
        %v332 = vmul.f32 %v331, 0.5
        %v333 = vmul.f32 %v329, 1.875
        %v334 = vadd.f32 %v333, 0.0
        %v335 = vmul.f32 %v334, %v332
        %v336 = vsub.f32 %v335, 0.75
        %v337 = vmul.f32 %v329, 1.8666667
        %v338 = vadd.f32 %v337, 0.0
        %v339 = vmul.f32 %v338, %v336
        %v340 = vmul.f32 %v332, 0.8
        %v341 = vsub.f32 %v339, %v340
        %v342 = vld [vmem:[%s1] sm:$0xff]
        %v343 = vld [vmem:[%s1 + $0x8] sm:$0xff]
        %v344 = vld [vmem:[%s1 + $0x10] sm:$0xff]
        %v345 = vld [vmem:[%s1 + $0x18] sm:$0xff]
        %v346 = vld [vmem:[%s1 + $0x20] sm:$0xff]
        %v347 = vld [vmem:[%s1 + $0x28] sm:$0xff]
        %v348 = vld [vmem:[%s1 + $0x30] sm:$0xff]
        %v349 = vld [vmem:[%s1 + $0x38] sm:$0xff]
        %v350 = vld [vmem:[%s1 + $0x40] sm:$0xff]
        %v351 = vld [vmem:[%s1 + $0x48] sm:$0xff]
        %v352 = vld [vmem:[%s1 + $0x50] sm:$0xff]
        %v353 = vld [vmem:[%s1 + $0x58] sm:$0xff]
        %v354 = vld [vmem:[%s1 + $0x60] sm:$0xff]
        %v355 = vld [vmem:[%s1 + $0x68] sm:$0xff]
        %v356 = vld [vmem:[%s1 + $0x70] sm:$0xff]
        %v357 = vld [vmem:[%s1 + $0x78] sm:$0xff]
        %v358 = vld [vmem:[%s1 + $0x80] sm:$0xff]
        %v359 = vld [vmem:[%s1 + $0x88] sm:$0xff]
        %v360 = vld [vmem:[%s1 + $0x90] sm:$0xff]
        %v361 = vld [vmem:[%s1 + $0x98] sm:$0xff]
        %v362 = vld [vmem:[%s1 + $0xa0] sm:$0xff]
        %v363 = vld [vmem:[%s1 + $0xa8] sm:$0xff]
        %v364 = vld [vmem:[%s1 + $0xb0] sm:$0xff]
        %v365 = vld [vmem:[%s1 + $0xb8] sm:$0xff]
        %v366 = vld [vmem:[%s1 + $0xc0] sm:$0xff]
        %v367 = vld [vmem:[%s1 + $0xc8] sm:$0xff]
        %v368 = vld [vmem:[%s1 + $0xd0] sm:$0xff]
        %v369 = vld [vmem:[%s1 + $0xd8] sm:$0xff]
        %v370 = vld [vmem:[%s1 + $0xe0] sm:$0xff]
        %v371 = vld [vmem:[%s1 + $0xe8] sm:$0xff]
        %v372 = vld [vmem:[%s1 + $0xf0] sm:$0xff]
        %v373 = vld [vmem:[%s1 + $0xf8] sm:$0xff]
        %v374 = vld [vmem:[%s1 + $0x100] sm:$0xff]
        %v375 = vld [vmem:[%s1 + $0x108] sm:$0xff]
        %v376 = vld [vmem:[%s1 + $0x110] sm:$0xff]
        %v377 = vld [vmem:[%s1 + $0x118] sm:$0xff]
        %v378 = vld [vmem:[%s1 + $0x120] sm:$0xff]
        %v379 = vld [vmem:[%s1 + $0x128] sm:$0xff]
        %v380 = vld [vmem:[%s1 + $0x130] sm:$0xff]
        %v381 = vld [vmem:[%s1 + $0x138] sm:$0xff]
        %v382 = vld [vmem:[%s1 + $0x140] sm:$0xff]
        %v383 = vld [vmem:[%s1 + $0x148] sm:$0xff]
        %v384 = vld [vmem:[%s1 + $0x150] sm:$0xff]
        %v385 = vld [vmem:[%s1 + $0x158] sm:$0xff]
        %v386 = vld [vmem:[%s1 + $0x160] sm:$0xff]
        %v387 = vld [vmem:[%s1 + $0x168] sm:$0xff]
        %v388 = vld [vmem:[%s1 + $0x170] sm:$0xff]
        %v389 = vld [vmem:[%s1 + $0x178] sm:$0xff]
        %v390 = vld [vmem:[%s2] sm:$0x1]
        %v392 = vperm.slane %v390, 0
        %394 = vmatpush.msra.mxu0 %v357
        %395 = vmatpush.msra.mxu0 %v356
        %396 = vmatpush.msra.mxu0 %v355
        %397 = vmatpush.msra.mxu0 %v354
        %398 = vmatpush.msra.mxu0 %v353
        %399 = vmatpush.msra.mxu0 %v352
        %400 = vmatpush.msra.mxu0 %v351
        %401 = vmatpush.msra.mxu0 %v350
        %402 = vmatpush.msra.mxu0 %v349
        %403 = vmatpush.msra.mxu0 %v348
        %404 = vmatpush.msra.mxu0 %v347
        %405 = vmatpush.msra.mxu0 %v346
        %406 = vmatpush.msra.mxu0 %v345
        %407 = vmatpush.msra.mxu0 %v344
        %408 = vmatpush.msra.mxu0 %v343
        %409 = vmatpush.msra.mxu0 %v342
        %410 = vmatmul.f32.gmra.mxu0 %v332
        %v411 = vpop.f32.mrf.mxu0
        %v412 = vadd.f32 %v392, %v411
        %413 = vdwg.mxu0
        %414 = vmatpush.msra.mxu0 %v373
        %415 = vmatpush.msra.mxu0 %v372
        %416 = vmatpush.msra.mxu0 %v371
        %417 = vmatpush.msra.mxu0 %v370
        %418 = vmatpush.msra.mxu0 %v369
        %419 = vmatpush.msra.mxu0 %v368
        %420 = vmatpush.msra.mxu0 %v367
        %421 = vmatpush.msra.mxu0 %v366
        %422 = vmatpush.msra.mxu0 %v365
        %423 = vmatpush.msra.mxu0 %v364
        %424 = vmatpush.msra.mxu0 %v363
        %425 = vmatpush.msra.mxu0 %v362
        %426 = vmatpush.msra.mxu0 %v361
        %427 = vmatpush.msra.mxu0 %v360
        %428 = vmatpush.msra.mxu0 %v359
        %429 = vmatpush.msra.mxu0 %v358
        %430 = vmatmul.f32.gmra.mxu0 %v336
        %v431 = vpop.f32.mrf.mxu0
        %v432 = vadd.f32 %v412, %v431
        %433 = vdwg.mxu0
        %434 = vmatpush.msra.mxu0 %v389
        %435 = vmatpush.msra.mxu0 %v388
        %436 = vmatpush.msra.mxu0 %v387
        %437 = vmatpush.msra.mxu0 %v386
        %438 = vmatpush.msra.mxu0 %v385
        %439 = vmatpush.msra.mxu0 %v384
        %440 = vmatpush.msra.mxu0 %v383
        %441 = vmatpush.msra.mxu0 %v382
        %442 = vmatpush.msra.mxu0 %v381
        %443 = vmatpush.msra.mxu0 %v380
        %444 = vmatpush.msra.mxu0 %v379
        %445 = vmatpush.msra.mxu0 %v378
        %446 = vmatpush.msra.mxu0 %v377
        %447 = vmatpush.msra.mxu0 %v376
        %448 = vmatpush.msra.mxu0 %v375
        %449 = vmatpush.msra.mxu0 %v374
        %450 = vmatmul.f32.gmra.mxu0 %v341
        %v451 = vpop.f32.mrf.mxu0
        %v452 = vadd.f32 %v432, %v451
        %453 = vdwg.mxu0
        %vm454 = vcmask 523264
        %v455 = vsel %vm454, %v452, 0.0
        %456 = vadd.xlane.f32.xlu0 %v455
        %v457 = vpop.xlane.xlu0 %456
        %v458 = vrcp.pop 64.0
        %v459 = vmul.f32 64.0, %v458
        %v460 = vsub.f32 1.0, %v459
        %v461 = vmul.f32 %v458, %v460
        %v462 = vadd.f32 %v458, %v461
        %vm463 = vweird.f32 %v458
        %v464 = vsel %vm463, %v458, %v462
        %v465 = vmul.f32 %v457, %v464
        %v466 = vsub.f32 %v452, %v465
        %v467 = vmul.f32 %v466, %v466
        %v468 = vsel %vm454, %v467, 0.0
        %469 = vadd.xlane.f32.xlu0 %v468
        %v470 = vpop.xlane.xlu0 %469
        %v471 = vmul.f32 %v470, %v464
        %v472 = vadd.f32 %v471, 1e-05
        %v473 = vrsqrt.pop %v472
        %v474 = vmul.f32 %v473, %v472
        %v475 = vmul.f32 %v474, %v473
        %v476 = vmul.f32 0.5, %v475
        %v477 = vsub.f32 1.5, %v476
        %v478 = vmul.f32 %v473, %v477
        %vm479 = vweird.f32 %v472
        %vm480 = vweird.f32 %v473
        %vm481 = vmor %vm479, %vm480
        %v482 = vsel %vm481, %v473, %v478
        %v483 = vmul.f32 %v466, %v482
        %v484 = vld [vmem:[%s3] sm:$0x1]
        %v486 = vperm.slane %v484, 0
        %v488 = vmul.f32 %v483, %v486
        %v489 = vld [vmem:[%s4] sm:$0x1]
        %v491 = vperm.slane %v489, 0
        %v493 = vadd.f32 %v488, %v491
        %v494 = vtanh.pop %v493
        %v495 = vsel %vm454, %v494, 0.0
        %v496 = vmul.f32 %v495, 4.0
        %v497 = vadd.f32 %v496, 0.0
        %v498 = vmul.f32 %v497, 0.5
        %v499 = vmul.f32 %v495, 1.875
        %v500 = vadd.f32 %v499, 0.0
        %v501 = vmul.f32 %v500, %v498
        %v502 = vsub.f32 %v501, 0.75
        %v503 = vmul.f32 %v495, 1.8666667
        %v504 = vadd.f32 %v503, 0.0
        %v505 = vmul.f32 %v504, %v502
        %v506 = vmul.f32 %v498, 0.8
        %v507 = vsub.f32 %v505, %v506
        %v508 = vld [vmem:[%s5] sm:$0xff]
        %v509 = vld [vmem:[%s5 + $0x8] sm:$0xff]
        %v510 = vld [vmem:[%s5 + $0x10] sm:$0xff]
        %v511 = vld [vmem:[%s5 + $0x18] sm:$0xff]
        %v512 = vld [vmem:[%s5 + $0x20] sm:$0xff]
        %v513 = vld [vmem:[%s5 + $0x28] sm:$0xff]
        %v514 = vld [vmem:[%s5 + $0x30] sm:$0xff]
        %v515 = vld [vmem:[%s5 + $0x38] sm:$0xff]
        %v516 = vld [vmem:[%s5 + $0x40] sm:$0xff]
        %v517 = vld [vmem:[%s5 + $0x48] sm:$0xff]
        %v518 = vld [vmem:[%s5 + $0x50] sm:$0xff]
        %v519 = vld [vmem:[%s5 + $0x58] sm:$0xff]
        %v520 = vld [vmem:[%s5 + $0x60] sm:$0xff]
        %v521 = vld [vmem:[%s5 + $0x68] sm:$0xff]
        %v522 = vld [vmem:[%s5 + $0x70] sm:$0xff]
        %v523 = vld [vmem:[%s5 + $0x78] sm:$0xff]
        %v524 = vld [vmem:[%s5 + $0x80] sm:$0xff]
        %v525 = vld [vmem:[%s5 + $0x88] sm:$0xff]
        %v526 = vld [vmem:[%s5 + $0x90] sm:$0xff]
        %v527 = vld [vmem:[%s5 + $0x98] sm:$0xff]
        %v528 = vld [vmem:[%s5 + $0xa0] sm:$0xff]
        %v529 = vld [vmem:[%s5 + $0xa8] sm:$0xff]
        %v530 = vld [vmem:[%s5 + $0xb0] sm:$0xff]
        %v531 = vld [vmem:[%s5 + $0xb8] sm:$0xff]
        %v532 = vld [vmem:[%s5 + $0xc0] sm:$0xff]
        %v533 = vld [vmem:[%s5 + $0xc8] sm:$0xff]
        %v534 = vld [vmem:[%s5 + $0xd0] sm:$0xff]
        %v535 = vld [vmem:[%s5 + $0xd8] sm:$0xff]
        %v536 = vld [vmem:[%s5 + $0xe0] sm:$0xff]
        %v537 = vld [vmem:[%s5 + $0xe8] sm:$0xff]
        %v538 = vld [vmem:[%s5 + $0xf0] sm:$0xff]
        %v539 = vld [vmem:[%s5 + $0xf8] sm:$0xff]
        %v540 = vld [vmem:[%s5 + $0x100] sm:$0xff]
        %v541 = vld [vmem:[%s5 + $0x108] sm:$0xff]
        %v542 = vld [vmem:[%s5 + $0x110] sm:$0xff]
        %v543 = vld [vmem:[%s5 + $0x118] sm:$0xff]
        %v544 = vld [vmem:[%s5 + $0x120] sm:$0xff]
        %v545 = vld [vmem:[%s5 + $0x128] sm:$0xff]
        %v546 = vld [vmem:[%s5 + $0x130] sm:$0xff]
        %v547 = vld [vmem:[%s5 + $0x138] sm:$0xff]
        %v548 = vld [vmem:[%s5 + $0x140] sm:$0xff]
        %v549 = vld [vmem:[%s5 + $0x148] sm:$0xff]
        %v550 = vld [vmem:[%s5 + $0x150] sm:$0xff]
        %v551 = vld [vmem:[%s5 + $0x158] sm:$0xff]
        %v552 = vld [vmem:[%s5 + $0x160] sm:$0xff]
        %v553 = vld [vmem:[%s5 + $0x168] sm:$0xff]
        %v554 = vld [vmem:[%s5 + $0x170] sm:$0xff]
        %v555 = vld [vmem:[%s5 + $0x178] sm:$0xff]
        %v556 = vld [vmem:[%s6] sm:$0x1]
        %v558 = vperm.slane %v556, 0
        %560 = vmatpush.msra.mxu0 %v523
        %561 = vmatpush.msra.mxu0 %v522
        %562 = vmatpush.msra.mxu0 %v521
        %563 = vmatpush.msra.mxu0 %v520
        %564 = vmatpush.msra.mxu0 %v519
        %565 = vmatpush.msra.mxu0 %v518
        %566 = vmatpush.msra.mxu0 %v517
        %567 = vmatpush.msra.mxu0 %v516
        %568 = vmatpush.msra.mxu0 %v515
        %569 = vmatpush.msra.mxu0 %v514
        %570 = vmatpush.msra.mxu0 %v513
        %571 = vmatpush.msra.mxu0 %v512
        %572 = vmatpush.msra.mxu0 %v511
        %573 = vmatpush.msra.mxu0 %v510
        %574 = vmatpush.msra.mxu0 %v509
        %575 = vmatpush.msra.mxu0 %v508
        %576 = vmatmul.f32.gmra.mxu0 %v498
        %v577 = vpop.f32.mrf.mxu0
        %v578 = vadd.f32 %v558, %v577
        %579 = vdwg.mxu0
        %580 = vmatpush.msra.mxu0 %v539
        %581 = vmatpush.msra.mxu0 %v538
        %582 = vmatpush.msra.mxu0 %v537
        %583 = vmatpush.msra.mxu0 %v536
        %584 = vmatpush.msra.mxu0 %v535
        %585 = vmatpush.msra.mxu0 %v534
        %586 = vmatpush.msra.mxu0 %v533
        %587 = vmatpush.msra.mxu0 %v532
        %588 = vmatpush.msra.mxu0 %v531
        %589 = vmatpush.msra.mxu0 %v530
        %590 = vmatpush.msra.mxu0 %v529
        %591 = vmatpush.msra.mxu0 %v528
        %592 = vmatpush.msra.mxu0 %v527
        %593 = vmatpush.msra.mxu0 %v526
        %594 = vmatpush.msra.mxu0 %v525
        %595 = vmatpush.msra.mxu0 %v524
        %596 = vmatmul.f32.gmra.mxu0 %v502
        %v597 = vpop.f32.mrf.mxu0
        %v598 = vadd.f32 %v578, %v597
        %599 = vdwg.mxu0
        %600 = vmatpush.msra.mxu0 %v555
        %601 = vmatpush.msra.mxu0 %v554
        %602 = vmatpush.msra.mxu0 %v553
        %603 = vmatpush.msra.mxu0 %v552
        %604 = vmatpush.msra.mxu0 %v551
        %605 = vmatpush.msra.mxu0 %v550
        %606 = vmatpush.msra.mxu0 %v549
        %607 = vmatpush.msra.mxu0 %v548
        %608 = vmatpush.msra.mxu0 %v547
        %609 = vmatpush.msra.mxu0 %v546
        %610 = vmatpush.msra.mxu0 %v545
        %611 = vmatpush.msra.mxu0 %v544
        %612 = vmatpush.msra.mxu0 %v543
        %613 = vmatpush.msra.mxu0 %v542
        %614 = vmatpush.msra.mxu0 %v541
        %615 = vmatpush.msra.mxu0 %v540
        %616 = vmatmul.f32.gmra.mxu0 %v507
        %v617 = vpop.f32.mrf.mxu0
        %v618 = vadd.f32 %v598, %v617
        %619 = vdwg.mxu0
        %vm620 = vcmask 261120
        %v621 = vsel %vm620, %v618, 0.0
        %622 = vadd.xlane.f32.xlu0 %v621
        %v623 = vpop.xlane.xlu0 %622
        %v624 = vrcp.pop 32.0
        %v625 = vmul.f32 32.0, %v624
        %v626 = vsub.f32 1.0, %v625
        %v627 = vmul.f32 %v624, %v626
        %v628 = vadd.f32 %v624, %v627
        %vm629 = vweird.f32 %v624
        %v630 = vsel %vm629, %v624, %v628
        %v631 = vmul.f32 %v623, %v630
        %v632 = vsub.f32 %v618, %v631
        %v633 = vmul.f32 %v632, %v632
        %v634 = vsel %vm620, %v633, 0.0
        %635 = vadd.xlane.f32.xlu0 %v634
        %v636 = vpop.xlane.xlu0 %635
        %v637 = vmul.f32 %v636, %v630
        %v638 = vadd.f32 %v637, 1e-05
        %v639 = vrsqrt.pop %v638
        %v640 = vmul.f32 %v639, %v638
        %v641 = vmul.f32 %v640, %v639
        %v642 = vmul.f32 0.5, %v641
        %v643 = vsub.f32 1.5, %v642
        %v644 = vmul.f32 %v639, %v643
        %vm645 = vweird.f32 %v638
        %vm646 = vweird.f32 %v639
        %vm647 = vmor %vm645, %vm646
        %v648 = vsel %vm647, %v639, %v644
        %v649 = vmul.f32 %v632, %v648
        %v650 = vld [vmem:[%s7] sm:$0x1]
        %v652 = vperm.slane %v650, 0
        %v654 = vmul.f32 %v649, %v652
        %v655 = vld [vmem:[%s8] sm:$0x1]
        %v657 = vperm.slane %v655, 0
        %v659 = vadd.f32 %v654, %v657
        %v660 = vsel %vm620, %v659, 0.0
        %661 = vst [vmem:[%s323] sm:$0xff] %v660
        %s662 = sand.u32 %s225, 1
        %s663 = scalar_lea.sflag [#allocation3], %s662
        %s664 = sand.u32 %s225, 1
        %s665 = smul.addr %s664, 8
        %s666 = scalar_lea.vmem [#allocation2], %s665
        // Predicated region
        $region57: #{tpu_custom_call.1} parent=55 // pred_check
          %p667 = pneg %p235
        $region58: #{tpu_custom_call.1} parent=55 // pred_check_branch
          %669 = sbr.rel (%p667) target = $region60
        $region59: #{tpu_custom_call.1} parent=55 // pred_region
          %671 = vsyncadd %s663, 0
          %s672 = smul.addr %s23, 8
          %s673 = scalar_lea.hbm %s9, %s672
          %s675 = sshll.u32 %s666, 4
          %s676 = int_to_ptr.vmem [resolvable:$true] %s675
          %s677 = sshll.u32 %s673, 4
          %s678 = int_to_ptr.hbm [resolvable:$true] %s677
          %680 = dma.vmem_to_hbm [thread:$0]  %s676, 128, %s678, %s663
        $region60: #{tpu_custom_call.1} parent=55 // pred_fallthru
          _
      $region56: #{tpu_custom_call.1} parent=5 // pred_fallthru
        _
      %p681 = scmp.le.s32.totalorder 2, %s18
      // Predicated region
      $region61: #{tpu_custom_call.1} parent=5 // pred_check
        %p682 = pneg %p681
      $region62: #{tpu_custom_call.1} parent=5 // pred_check_branch
        %684 = sbr.rel (%p682) target = $region64
      $region63: #{tpu_custom_call.1} parent=5 // pred_region
        %s685 = ssub.s32 %s18, 2
        // Predicated region
        $region65: #{tpu_custom_call.1} parent=63 // pred_check
          %p686 = pneg %p241
        $region66: #{tpu_custom_call.1} parent=63 // pred_check_branch
          %688 = sbr.rel (%p686) target = $region68
        $region67: #{tpu_custom_call.1} parent=63 // pred_region
          %s689 = sand.u32 %s226, 1
          %s690 = scalar_lea.sflag [#allocation3], %s689
          %s691 = sand.u32 %s226, 1
          %s692 = smul.addr %s691, 8
          %s693 = scalar_lea.vmem [#allocation2], %s692
          %695 = dma.done %s690, 128
        $region68: #{tpu_custom_call.1} parent=63 // pred_fallthru
          _
      $region64: #{tpu_custom_call.1} parent=5 // pred_fallthru
        _
    $region6: #{tpu_custom_call.1} parent=1 // loop_footer
      %s22 = sadd.s32 1, %s18
    $region7: #{tpu_custom_call.1} parent=1 // loop_footer_branch
      %17 = sbr.rel target = $region3
    $region8: #{tpu_custom_call.1} parent=1 // loop_exit
      _
    %696 = vsyncpa [#allocation3], 1
    %s697 = scalar_lea.sflag [#allocation3], 1
    %698 = vsyncpa %s697, 1

</llo_original>
